<compile_context>
chip_gen: v7x
topology: tpu7x:2x2x1
jax: 0.10.0
libtpu: 0.0.40
codegen_flags: <defaults>
</compile_context>

<pallas_src>
import jax
import jax.numpy as jnp
from jax.experimental import pallas as pl
from jax.experimental.pallas import tpu as pltpu

LATENT_DIM = 64
IN_DIM = 28 * 28          # 784; kept ragged (full-array-dim blocks), no K padding
HID_DIM = 512


def encoder_kernel(x_ref, w1_ref, b1_ref, w2_ref, b2_ref, o_ref):
    # x arrives as f32 (single HBM read of the raw input); cast to bf16 for the MXU.
    x = x_ref[...].astype(jnp.bfloat16)
    # Layer 1: (TB, 784) bf16 @ (784, 512) bf16 -> f32 accumulate.
    h = jnp.dot(x, w1_ref[...], preferred_element_type=jnp.float32)
    h = jnp.maximum(h + b1_ref[...], 0.0)                # bias + ReLU in f32 (VPU)
    # Layer 2: bf16 MXU path, f32 accumulation; output block is lane-ragged (64).
    z = jnp.dot(h.astype(w2_ref.dtype), w2_ref[...],
                preferred_element_type=jnp.float32)
    o_ref[...] = (z + b2_ref[...]).astype(o_ref.dtype)


def _cdiv(a, b):
    return -(-a // b)


def _round_up(n, m):
    return _cdiv(n, m) * m


def encoder_forward(x, w1_t, b1, w2_t, b2, *, max_tb=1024):
    """x: (B, 1, 28, 28) or anything flattening to (-1, 784). Returns (B, LATENT_DIM) f32."""
    x2d = x.reshape(-1, IN_DIM).astype(jnp.float32)
    B = x2d.shape[0]

    # Adaptive batch tile: multiple of 8 (sublanes), capped at max_tb.
    #   * keeps padding waste < 8 rows per call,
    #   * keeps the grid >= 2 steps for mid/large batches so both v7x TCs work.
    n_tiles = max(_cdiv(B, max_tb), 1)
    if n_tiles == 1 and B >= 256:
        n_tiles = 2                       # v7x megacore: give each TensorCore a tile
    tb = min(_round_up(max(_cdiv(B, n_tiles), 8), 8), max_tb)
    b_pad = _round_up(B, tb)
    if b_pad != B:                        # only copy x when the batch is ragged
        x2d = jnp.pad(x2d, ((0, b_pad - B), (0, 0)))

    # Weights in bf16 (one-time tiny cast), biases in f32. No K / lane padding.
    w1_b = w1_t.reshape(IN_DIM, HID_DIM).astype(jnp.bfloat16)
    w2_b = w2_t.reshape(HID_DIM, LATENT_DIM).astype(jnp.bfloat16)
    b1_f = b1.reshape(1, HID_DIM).astype(jnp.float32)
    b2_f = b2.reshape(1, LATENT_DIM).astype(jnp.float32)

    grid = (b_pad // tb,)

    cost = pl.CostEstimate(
        flops=2 * b_pad * (IN_DIM * HID_DIM + HID_DIM * LATENT_DIM),
        transcendentals=0,
        bytes_accessed=(b_pad * IN_DIM * 4               # x stream (f32, read once)
                        + IN_DIM * HID_DIM * 2           # w1 bf16
                        + HID_DIM * LATENT_DIM * 2       # w2 bf16
                        + HID_DIM * 4 + LATENT_DIM * 4   # biases f32
                        + b_pad * LATENT_DIM * 4),       # output f32
    )

    out = pl.pallas_call(
        encoder_kernel,
        out_shape=jax.ShapeDtypeStruct((b_pad, LATENT_DIM), jnp.float32),
        grid=grid,
        in_specs=[
            # Pipelined f32 input tile; last dim == full array dim (784) is legal.
            pl.BlockSpec((tb, IN_DIM), lambda i: (i, 0)),
            # VMEM-resident weights/biases (constant index maps).
            pl.BlockSpec((IN_DIM, HID_DIM), lambda i: (0, 0)),
            pl.BlockSpec((1, HID_DIM), lambda i: (0, 0)),
            pl.BlockSpec((HID_DIM, LATENT_DIM), lambda i: (0, 0)),
            pl.BlockSpec((1, LATENT_DIM), lambda i: (0, 0)),
        ],
        out_specs=pl.BlockSpec((tb, LATENT_DIM), lambda i: (i, 0)),
        compiler_params=pltpu.CompilerParams(
            dimension_semantics=("parallel",),
            # Live set at tb=1024 is ~12 MiB (x 2x3.1 MiB f32, h 2+1 MiB,
            # out 2x0.25 MiB, weights ~0.9 MiB); 48 MiB leaves headroom even
            # on v7x (64 MiB physical) if max_tb is raised.
            vmem_limit_bytes=48 << 20,
        ),
        cost_estimate=cost,
    )(x2d, w1_b, b1_f, w2_b, b2_f)

    return out[:B] if b_pad != B else out


def init_params(key):
    """Deterministic init mimicking nn.Linear's uniform(-1/sqrt(fan_in), 1/sqrt(fan_in))."""
    k1, k2, k3, k4 = jax.random.split(key, 4)
    bound1 = 1.0 / (IN_DIM ** 0.5)
    bound2 = 1.0 / (HID_DIM ** 0.5)
    # Stored already transposed: (in, out) so the kernel does x @ W (== torch x @ W.T).
    w1_t = jax.random.uniform(k1, (IN_DIM, HID_DIM), jnp.float32, -bound1, bound1)
    b1 = jax.random.uniform(k2, (1, HID_DIM), jnp.float32, -bound1, bound1)
    w2_t = jax.random.uniform(k3, (HID_DIM, LATENT_DIM), jnp.float32, -bound2, bound2)
    b2 = jax.random.uniform(k4, (1, LATENT_DIM), jnp.float32, -bound2, bound2)
    return w1_t, b1, w2_t, b2


def _reference(x, w1_t, b1, w2_t, b2):
    """Pure-JAX reference mirroring the kernel's bf16-operand / f32-accumulate math."""
    x2d = x.reshape(-1, IN_DIM)
    xb = x2d.astype(jnp.bfloat16).astype(jnp.float32)
    w1b = w1_t.astype(jnp.bfloat16).astype(jnp.float32)
    w2b = w2_t.astype(jnp.bfloat16).astype(jnp.float32)
    h = jnp.maximum(xb @ w1b + b1, 0.0)
    return h.astype(jnp.bfloat16).astype(jnp.float32) @ w2b + b2


if __name__ == "__main__":
    key = jax.random.PRNGKey(0)
    kx, kp = jax.random.split(key)
    w1_t, b1, w2_t, b2 = init_params(kp)

    # Small NCHW batch of 28x28 "images".
    B = 2
    x = jax.random.normal(kx, (B, 1, 28, 28), jnp.float32)
    z = encoder_forward(x, w1_t, b1, w2_t, b2)
    jax.block_until_ready(z)
    assert z.shape == (B, LATENT_DIM)

    ref = _reference(x, w1_t, b1, w2_t, b2)
    assert jnp.allclose(z, ref, atol=1e-2, rtol=1e-2), float(jnp.max(jnp.abs(z - ref)))
    # Loose check against the pure-f32 torch-equivalent math (bf16 drift expected).
    x2d = x.reshape(-1, IN_DIM)
    ref_f32 = jnp.maximum(x2d @ w1_t + b1, 0.0) @ w2_t + b2
    assert jnp.allclose(z, ref_f32, atol=5e-2, rtol=5e-2)

    # Exercise the ragged-batch (padding) path too.
    B2 = 20
    x2 = jax.random.normal(kx, (B2, 1, 28, 28), jnp.float32)
    z2 = encoder_forward(x2, w1_t, b1, w2_t, b2)
    jax.block_until_ready(z2)
    assert z2.shape == (B2, LATENT_DIM)
    ref2 = _reference(x2, w1_t, b1, w2_t, b2)
    assert jnp.allclose(z2, ref2, atol=1e-2, rtol=1e-2)

    print("KERNEL_OK")
</pallas_src>

<mosaic_0001>
module attributes {stable_mosaic.version = 11 : i64} {
  func.func @encoder_kernel(%arg0: i32, %arg1: memref<8x784xf32, #tpu.memory_space<vmem>>, %arg2: memref<784x512xbf16, #tpu.memory_space<vmem>>, %arg3: memref<1x512xf32, #tpu.memory_space<vmem>>, %arg4: memref<512x64xbf16, #tpu.memory_space<vmem>>, %arg5: memref<1x64xf32, #tpu.memory_space<vmem>>, %arg6: memref<8x64xf32, #tpu.memory_space<vmem>>) attributes {dimension_semantics = [#tpu.dimension_semantics<parallel>], iteration_bounds = array<i64: 1>, scalar_prefetch = 0 : i64, scratch_operands = 0 : i64, tpu.core_type = #tpu.core_type<tc>, window_params = [{transform_indices = @transform_0, window_bounds = array<i64: 8, 784>}, {pipeline_mode = #tpu.pipeline_mode<synchronous>, transform_indices = @transform_1, window_bounds = array<i64: 784, 512>}, {pipeline_mode = #tpu.pipeline_mode<synchronous>, transform_indices = @transform_2, window_bounds = array<i64: 1, 512>}, {pipeline_mode = #tpu.pipeline_mode<synchronous>, transform_indices = @transform_3, window_bounds = array<i64: 512, 64>}, {pipeline_mode = #tpu.pipeline_mode<synchronous>, transform_indices = @transform_4, window_bounds = array<i64: 1, 64>}, {transform_indices = @transform_5, window_bounds = array<i64: 8, 64>}]} {
    %c0 = arith.constant 0 : index
    %c0_0 = arith.constant 0 : index
    %0 = vector.load %arg1[%c0, %c0_0] : memref<8x784xf32, #tpu.memory_space<vmem>>, vector<8x784xf32>
    %1 = arith.truncf %0 : vector<8x784xf32> to vector<8x784xbf16>
    %c0_1 = arith.constant 0 : index
    %c0_2 = arith.constant 0 : index
    %2 = vector.load %arg2[%c0_1, %c0_2] : memref<784x512xbf16, #tpu.memory_space<vmem>>, vector<784x512xbf16>
    %cst = arith.constant dense<0.000000e+00> : vector<8x512xf32>
    %3 = tpu.matmul %1, %2, %cst {dimension_numbers = #tpu.dot_dimension_numbers<[1], [0], [0], [1], [0, 0, 1, 1], [], []>} : vector<8x784xbf16>, vector<784x512xbf16>, vector<8x512xf32> -> vector<8x512xf32>
    %c0_3 = arith.constant 0 : index
    %c0_4 = arith.constant 0 : index
    %4 = vector.load %arg3[%c0_3, %c0_4] : memref<1x512xf32, #tpu.memory_space<vmem>>, vector<1x512xf32>
    %5 = vector.broadcast %4 : vector<1x512xf32> to vector<8x512xf32>
    %6 = arith.addf %3, %5 : vector<8x512xf32>
    %cst_5 = arith.constant 0.000000e+00 : f32
    %7 = vector.broadcast %cst_5 : f32 to vector<8x512xf32>
    %8 = arith.maximumf %6, %7 : vector<8x512xf32>
    %9 = arith.truncf %8 : vector<8x512xf32> to vector<8x512xbf16>
    %c0_6 = arith.constant 0 : index
    %c0_7 = arith.constant 0 : index
    %10 = vector.load %arg4[%c0_6, %c0_7] : memref<512x64xbf16, #tpu.memory_space<vmem>>, vector<512x64xbf16>
    %cst_8 = arith.constant dense<0.000000e+00> : vector<8x64xf32>
    %11 = tpu.matmul %9, %10, %cst_8 {dimension_numbers = #tpu.dot_dimension_numbers<[1], [0], [0], [1], [0, 0, 1, 1], [], []>} : vector<8x512xbf16>, vector<512x64xbf16>, vector<8x64xf32> -> vector<8x64xf32>
    %c0_9 = arith.constant 0 : index
    %c0_10 = arith.constant 0 : index
    %12 = vector.load %arg5[%c0_9, %c0_10] : memref<1x64xf32, #tpu.memory_space<vmem>>, vector<1x64xf32>
    %13 = vector.broadcast %12 : vector<1x64xf32> to vector<8x64xf32>
    %14 = arith.addf %11, %13 : vector<8x64xf32>
    %c0_11 = arith.constant 0 : index
    %c0_12 = arith.constant 0 : index
    %15 = vector.load %arg6[%c0_11, %c0_12] : memref<8x64xf32, #tpu.memory_space<vmem>>, vector<8x64xf32>
    tpu.vector_store %arg6[%c0_11, %c0_12], %14 {strides = array<i32>} : memref<8x64xf32, #tpu.memory_space<vmem>>, vector<8x64xf32>,
    return
  }
  func.func @transform_0(%arg0: i32) -> (i32, i32) {
    %c0_i32 = arith.constant 0 : i32
    %c0_i32_0 = arith.constant 0 : i32
    return %arg0, %c0_i32 : i32, i32
  }
  func.func @transform_1(%arg0: i32) -> (i32, i32) {
    %c0_i32 = arith.constant 0 : i32
    %c0_i32_0 = arith.constant 0 : i32
    %c0_i32_1 = arith.constant 0 : i32
    return %c0_i32, %c0_i32_0 : i32, i32
  }
  func.func @transform_2(%arg0: i32) -> (i32, i32) {
    %c0_i32 = arith.constant 0 : i32
    %c0_i32_0 = arith.constant 0 : i32
    %c0_i32_1 = arith.constant 0 : i32
    return %c0_i32, %c0_i32_0 : i32, i32
  }
  func.func @transform_3(%arg0: i32) -> (i32, i32) {
    %c0_i32 = arith.constant 0 : i32
    %c0_i32_0 = arith.constant 0 : i32
    %c0_i32_1 = arith.constant 0 : i32
    return %c0_i32, %c0_i32_0 : i32, i32
  }
  func.func @transform_4(%arg0: i32) -> (i32, i32) {
    %c0_i32 = arith.constant 0 : i32
    %c0_i32_0 = arith.constant 0 : i32
    %c0_i32_1 = arith.constant 0 : i32
    return %c0_i32, %c0_i32_0 : i32, i32
  }
  func.func @transform_5(%arg0: i32) -> (i32, i32) {
    %c0_i32 = arith.constant 0 : i32
    %c0_i32_0 = arith.constant 0 : i32
    return %arg0, %c0_i32 : i32, i32
  }
}

</mosaic_0001>

<llo_original>
// kernel: tpu_custom_call.1
$region0: #{tpu_custom_call.1}
  #allocation0 [shape = 'u32[]', space=smem, size = 0x4, offset = 0x4, fixed_abs, tag = 'smem constant byte address 0x4 - core index']
  #allocation1 [shape = 'u32[144,128]{1,0:T(1,128)}', space=vmem, size = 0x12000, scoped, tag = 'internal scratch']
  %s0 = inlined_call_operand.vmem [shape: f32[8,784], index: 0, kind: input, shape index: {}]
  %s1 = inlined_call_operand.hbm [shape: bf16[784,512], index: 1, kind: input, shape index: {}]
  %s2 = inlined_call_operand.vmem [shape: f32[1,512], index: 2, kind: input, shape index: {}]
  %s3 = inlined_call_operand.vmem [shape: bf16[512,64], index: 3, kind: input, shape index: {}]
  %s4 = inlined_call_operand.vmem [shape: f32[1,64], index: 4, kind: input, shape index: {}]
  %s5 = inlined_call_operand.hbm [shape: f32[8,64], index: 5, kind: output, shape index: {}]
  %s6 = sld [smem:[#allocation0]]
  $region34: #{tpu_custom_call.1} parent=0
    _
  %s8 = ssub.s32 1, %s6
  %s9 = scalar_select 0, %s8, %s6
  $region1: #{tpu_custom_call.1} parent=0
    #allocation2 [shape = 'u8[802816]{0}', space=vmem, size = 0xc4000, scoped, tag = 'input window, operand 1, single buffered']
    #allocation3 [shape = 's32[1]{0}', space=sflag, size = 0x4, scoped, tag = 'scoped memory for tpu_custom_call.1']
    #allocation4 [shape = 's32[1]{0}', space=sflag, size = 0x4, scoped, tag = 'scoped memory for tpu_custom_call.1']
    #allocation5 [shape = 'u8[4096]{0}', space=vmem, size = 0x1000, scoped, tag = 'output window, operand 0, single buffered']
    %10 = vsyncpa [#allocation3], 0
    %11 = vsyncpa [#allocation4], 0
    // Predicated region
    $region2: #{tpu_custom_call.1} parent=1 // pred_check
      _
    $region3: #{tpu_custom_call.1} parent=1 // pred_check_branch
      %13 = sbr.rel (0) target = $region5
    $region4: #{tpu_custom_call.1} parent=1 // pred_region
      _
    $region5: #{tpu_custom_call.1} parent=1 // pred_fallthru
      _
    // Predicated region
    $region6: #{tpu_custom_call.1} parent=1 // pred_check
      _
    $region7: #{tpu_custom_call.1} parent=1 // pred_check_branch
      %15 = sbr.rel (0) target = $region9
    $region8: #{tpu_custom_call.1} parent=1 // pred_region
      %s17 = ssub.s32 25088, 25088
      %18 = vsyncadd [#allocation3], %s17
      %s19 = sshll.u32 [#allocation2], 4
      %s20 = int_to_ptr.vmem [resolvable:$true] %s19
      %25 = dma.hbm_to_vmem [thread:$0]  %s1, 25088, %s20, [#allocation3], 256, 256, 16
    $region9: #{tpu_custom_call.1} parent=1 // pred_fallthru
      _
    // Predicated region
    $region10: #{tpu_custom_call.1} parent=1 // pred_check
      _
    $region11: #{tpu_custom_call.1} parent=1 // pred_check_branch
      %27 = sbr.rel (0) target = $region13
    $region12: #{tpu_custom_call.1} parent=1 // pred_region
      _
    $region13: #{tpu_custom_call.1} parent=1 // pred_fallthru
      _
    // Predicated region
    $region14: #{tpu_custom_call.1} parent=1 // pred_check
      _
    $region15: #{tpu_custom_call.1} parent=1 // pred_check_branch
      %29 = sbr.rel (0) target = $region17
    $region16: #{tpu_custom_call.1} parent=1 // pred_region
      _
    $region17: #{tpu_custom_call.1} parent=1 // pred_fallthru
      _
    // Predicated region
    $region18: #{tpu_custom_call.1} parent=1 // pred_check
      _
    $region19: #{tpu_custom_call.1} parent=1 // pred_check_branch
      %31 = sbr.rel (0) target = $region21
    $region20: #{tpu_custom_call.1} parent=1 // pred_region
      _
    $region21: #{tpu_custom_call.1} parent=1 // pred_fallthru
      _
    // Predicated region
    $region22: #{tpu_custom_call.1} parent=1 // pred_check
      _
    $region23: #{tpu_custom_call.1} parent=1 // pred_check_branch
      %33 = sbr.rel (0) target = $region25
    $region24: #{tpu_custom_call.1} parent=1 // pred_region
      %34 = dma.done [#allocation3], 25088
    $region25: #{tpu_custom_call.1} parent=1 // pred_fallthru
      _
    %v36 = vld [vmem:[%s0] sm:$0xff]
    %v37 = vld [vmem:[%s0 + $0x8] sm:$0xff]
    %v38 = vld [vmem:[%s0 + $0x10] sm:$0xff]
    %v39 = vld [vmem:[%s0 + $0x18] sm:$0xff]
    %v40 = vld [vmem:[%s0 + $0x20] sm:$0xff]
    %v41 = vld [vmem:[%s0 + $0x28] sm:$0xff]
    %v42 = vld [vmem:[%s0 + $0x30] sm:$0xff]
    %v43 = vpack.c.bf16 %v36, %v36
    %v44 = vpack.c.bf16 %v37, %v37
    %v45 = vpack.c.bf16 %v38, %v38
    %v46 = vpack.c.bf16 %v39, %v39
    %v47 = vpack.c.bf16 %v40, %v40
    %v48 = vpack.c.bf16 %v41, %v41
    %v49 = vpack.c.bf16 %v42, %v42
    %v50 = vld [vmem:[#allocation2] sm:$0xff]
    %v51 = vld [vmem:[#allocation2 + $0x8] sm:$0xff]
    %v52 = vld [vmem:[#allocation2 + $0x10] sm:$0xff]
    %v53 = vld [vmem:[#allocation2 + $0x18] sm:$0xff]
    %v54 = vld [vmem:[#allocation2 + $0x20] sm:$0xff]
    %v55 = vld [vmem:[#allocation2 + $0x28] sm:$0xff]
    %v56 = vld [vmem:[#allocation2 + $0x30] sm:$0xff]
    %v57 = vld [vmem:[#allocation2 + $0x38] sm:$0xff]
    %v58 = vld [vmem:[#allocation2 + $0x40] sm:$0xff]
    %v59 = vld [vmem:[#allocation2 + $0x48] sm:$0xff]
    %v60 = vld [vmem:[#allocation2 + $0x50] sm:$0xff]
    %v61 = vld [vmem:[#allocation2 + $0x58] sm:$0xff]
    %v62 = vld [vmem:[#allocation2 + $0x60] sm:$0xff]
    %v63 = vld [vmem:[#allocation2 + $0x68] sm:$0xff]
    %v64 = vld [vmem:[#allocation2 + $0x70] sm:$0xff]
    %v65 = vld [vmem:[#allocation2 + $0x78] sm:$0xff]
    %v66 = vld [vmem:[#allocation2 + $0x80] sm:$0xff]
    %v67 = vld [vmem:[#allocation2 + $0x88] sm:$0xff]
    %v68 = vld [vmem:[#allocation2 + $0x90] sm:$0xff]
    %v69 = vld [vmem:[#allocation2 + $0x98] sm:$0xff]
    %v70 = vld [vmem:[#allocation2 + $0xa0] sm:$0xff]
    %v71 = vld [vmem:[#allocation2 + $0xa8] sm:$0xff]
    %v72 = vld [vmem:[#allocation2 + $0xb0] sm:$0xff]
    %v73 = vld [vmem:[#allocation2 + $0xb8] sm:$0xff]
    %v74 = vld [vmem:[#allocation2 + $0xc0] sm:$0xff]
    %v75 = vld [vmem:[#allocation2 + $0xc8] sm:$0xff]
    %v76 = vld [vmem:[#allocation2 + $0xd0] sm:$0xff]
    %v77 = vld [vmem:[#allocation2 + $0xd8] sm:$0xff]
    %v78 = vld [vmem:[#allocation2 + $0xe0] sm:$0xff]
    %v79 = vld [vmem:[#allocation2 + $0xe8] sm:$0xff]
    %v80 = vld [vmem:[#allocation2 + $0xf0] sm:$0xff]
    %v81 = vld [vmem:[#allocation2 + $0xf8] sm:$0xff]
    %v82 = vld [vmem:[#allocation2 + $0x100] sm:$0xff]
    %v83 = vld [vmem:[#allocation2 + $0x108] sm:$0xff]
    %v84 = vld [vmem:[#allocation2 + $0x110] sm:$0xff]
    %v85 = vld [vmem:[#allocation2 + $0x118] sm:$0xff]
    %v86 = vld [vmem:[#allocation2 + $0x120] sm:$0xff]
    %v87 = vld [vmem:[#allocation2 + $0x128] sm:$0xff]
    %v88 = vld [vmem:[#allocation2 + $0x130] sm:$0xff]
    %v89 = vld [vmem:[#allocation2 + $0x138] sm:$0xff]
    %v90 = vld [vmem:[#allocation2 + $0x140] sm:$0xff]
    %v91 = vld [vmem:[#allocation2 + $0x148] sm:$0xff]
    %v92 = vld [vmem:[#allocation2 + $0x150] sm:$0xff]
    %v93 = vld [vmem:[#allocation2 + $0x158] sm:$0xff]
    %v94 = vld [vmem:[#allocation2 + $0x160] sm:$0xff]
    %v95 = vld [vmem:[#allocation2 + $0x168] sm:$0xff]
    %v96 = vld [vmem:[#allocation2 + $0x170] sm:$0xff]
    %v97 = vld [vmem:[#allocation2 + $0x178] sm:$0xff]
    %v98 = vld [vmem:[#allocation2 + $0x180] sm:$0xff]
    %v99 = vld [vmem:[#allocation2 + $0x188] sm:$0xff]
    %v100 = vld [vmem:[#allocation2 + $0x190] sm:$0xff]
    %v101 = vld [vmem:[#allocation2 + $0x198] sm:$0xff]
    %v102 = vld [vmem:[#allocation2 + $0x1a0] sm:$0xff]
    %v103 = vld [vmem:[#allocation2 + $0x1a8] sm:$0xff]
    %v104 = vld [vmem:[#allocation2 + $0x1b0] sm:$0xff]
    %v105 = vld [vmem:[#allocation2 + $0x1b8] sm:$0xff]
    %v106 = vld [vmem:[#allocation2 + $0x1c0] sm:$0xff]
    %v107 = vld [vmem:[#allocation2 + $0x1c8] sm:$0xff]
    %v108 = vld [vmem:[#allocation2 + $0x1d0] sm:$0xff]
    %v109 = vld [vmem:[#allocation2 + $0x1d8] sm:$0xff]
    %v110 = vld [vmem:[#allocation2 + $0x1e0] sm:$0xff]
    %v111 = vld [vmem:[#allocation2 + $0x1e8] sm:$0xff]
    %v112 = vld [vmem:[#allocation2 + $0x1f0] sm:$0xff]
    %v113 = vld [vmem:[#allocation2 + $0x1f8] sm:$0xff]
    %v114 = vld [vmem:[#allocation2 + $0x200] sm:$0xff]
    %v115 = vld [vmem:[#allocation2 + $0x208] sm:$0xff]
    %v116 = vld [vmem:[#allocation2 + $0x210] sm:$0xff]
    %v117 = vld [vmem:[#allocation2 + $0x218] sm:$0xff]
    %v118 = vld [vmem:[#allocation2 + $0x220] sm:$0xff]
    %v119 = vld [vmem:[#allocation2 + $0x228] sm:$0xff]
    %v120 = vld [vmem:[#allocation2 + $0x230] sm:$0xff]
    %v121 = vld [vmem:[#allocation2 + $0x238] sm:$0xff]
    %v122 = vld [vmem:[#allocation2 + $0x240] sm:$0xff]
    %v123 = vld [vmem:[#allocation2 + $0x248] sm:$0xff]
    %v124 = vld [vmem:[#allocation2 + $0x250] sm:$0xff]
    %v125 = vld [vmem:[#allocation2 + $0x258] sm:$0xff]
    %v126 = vld [vmem:[#allocation2 + $0x260] sm:$0xff]
    %v127 = vld [vmem:[#allocation2 + $0x268] sm:$0xff]
    %v128 = vld [vmem:[#allocation2 + $0x270] sm:$0xff]
    %v129 = vld [vmem:[#allocation2 + $0x278] sm:$0xff]
    %v130 = vld [vmem:[#allocation2 + $0x280] sm:$0xff]
    %v131 = vld [vmem:[#allocation2 + $0x288] sm:$0xff]
    %v132 = vld [vmem:[#allocation2 + $0x290] sm:$0xff]
    %v133 = vld [vmem:[#allocation2 + $0x298] sm:$0xff]
    %v134 = vld [vmem:[#allocation2 + $0x2a0] sm:$0xff]
    %v135 = vld [vmem:[#allocation2 + $0x2a8] sm:$0xff]
    %v136 = vld [vmem:[#allocation2 + $0x2b0] sm:$0xff]
    %v137 = vld [vmem:[#allocation2 + $0x2b8] sm:$0xff]
    %v138 = vld [vmem:[#allocation2 + $0x2c0] sm:$0xff]
    %v139 = vld [vmem:[#allocation2 + $0x2c8] sm:$0xff]
    %v140 = vld [vmem:[#allocation2 + $0x2d0] sm:$0xff]
    %v141 = vld [vmem:[#allocation2 + $0x2d8] sm:$0xff]
    %v142 = vld [vmem:[#allocation2 + $0x2e0] sm:$0xff]
    %v143 = vld [vmem:[#allocation2 + $0x2e8] sm:$0xff]
    %v144 = vld [vmem:[#allocation2 + $0x2f0] sm:$0xff]
    %v145 = vld [vmem:[#allocation2 + $0x2f8] sm:$0xff]
    %v146 = vld [vmem:[#allocation2 + $0x300] sm:$0xff]
    %v147 = vld [vmem:[#allocation2 + $0x308] sm:$0xff]
    %v148 = vld [vmem:[#allocation2 + $0x310] sm:$0xff]
    %v149 = vld [vmem:[#allocation2 + $0x318] sm:$0xff]
    %v150 = vld [vmem:[#allocation2 + $0x320] sm:$0xff]
    %v151 = vld [vmem:[#allocation2 + $0x328] sm:$0xff]
    %v152 = vld [vmem:[#allocation2 + $0x330] sm:$0xff]
    %v153 = vld [vmem:[#allocation2 + $0x338] sm:$0xff]
    %v154 = vld [vmem:[#allocation2 + $0x340] sm:$0xff]
    %v155 = vld [vmem:[#allocation2 + $0x348] sm:$0xff]
    %v156 = vld [vmem:[#allocation2 + $0x350] sm:$0xff]
    %v157 = vld [vmem:[#allocation2 + $0x358] sm:$0xff]
    %v158 = vld [vmem:[#allocation2 + $0x360] sm:$0xff]
    %v159 = vld [vmem:[#allocation2 + $0x368] sm:$0xff]
    %v160 = vld [vmem:[#allocation2 + $0x370] sm:$0xff]
    %v161 = vld [vmem:[#allocation2 + $0x378] sm:$0xff]
    %v162 = vld [vmem:[#allocation2 + $0x380] sm:$0xff]
    %v163 = vld [vmem:[#allocation2 + $0x388] sm:$0xff]
    %v164 = vld [vmem:[#allocation2 + $0x390] sm:$0xff]
    %v165 = vld [vmem:[#allocation2 + $0x398] sm:$0xff]
    %v166 = vld [vmem:[#allocation2 + $0x3a0] sm:$0xff]
    %v167 = vld [vmem:[#allocation2 + $0x3a8] sm:$0xff]
    %v168 = vld [vmem:[#allocation2 + $0x3b0] sm:$0xff]
    %v169 = vld [vmem:[#allocation2 + $0x3b8] sm:$0xff]
    %v170 = vld [vmem:[#allocation2 + $0x3c0] sm:$0xff]
    %v171 = vld [vmem:[#allocation2 + $0x3c8] sm:$0xff]
    %v172 = vld [vmem:[#allocation2 + $0x3d0] sm:$0xff]
    %v173 = vld [vmem:[#allocation2 + $0x3d8] sm:$0xff]
    %v174 = vld [vmem:[#allocation2 + $0x3e0] sm:$0xff]
    %v175 = vld [vmem:[#allocation2 + $0x3e8] sm:$0xff]
    %v176 = vld [vmem:[#allocation2 + $0x3f0] sm:$0xff]
    %v177 = vld [vmem:[#allocation2 + $0x3f8] sm:$0xff]
    %v178 = vld [vmem:[#allocation2 + $0x400] sm:$0xff]
    %v179 = vld [vmem:[#allocation2 + $0x408] sm:$0xff]
    %v180 = vld [vmem:[#allocation2 + $0x410] sm:$0xff]
    %v181 = vld [vmem:[#allocation2 + $0x418] sm:$0xff]
    %v182 = vld [vmem:[#allocation2 + $0x420] sm:$0xff]
    %v183 = vld [vmem:[#allocation2 + $0x428] sm:$0xff]
    %v184 = vld [vmem:[#allocation2 + $0x430] sm:$0xff]
    %v185 = vld [vmem:[#allocation2 + $0x438] sm:$0xff]
    %v186 = vld [vmem:[#allocation2 + $0x440] sm:$0xff]
    %v187 = vld [vmem:[#allocation2 + $0x448] sm:$0xff]
    %v188 = vld [vmem:[#allocation2 + $0x450] sm:$0xff]
    %v189 = vld [vmem:[#allocation2 + $0x458] sm:$0xff]
    %v190 = vld [vmem:[#allocation2 + $0x460] sm:$0xff]
    %v191 = vld [vmem:[#allocation2 + $0x468] sm:$0xff]
    %v192 = vld [vmem:[#allocation2 + $0x470] sm:$0xff]
    %v193 = vld [vmem:[#allocation2 + $0x478] sm:$0xff]
    %v194 = vld [vmem:[#allocation2 + $0x480] sm:$0xff]
    %v195 = vld [vmem:[#allocation2 + $0x488] sm:$0xff]
    %v196 = vld [vmem:[#allocation2 + $0x490] sm:$0xff]
    %v197 = vld [vmem:[#allocation2 + $0x498] sm:$0xff]
    %v198 = vld [vmem:[#allocation2 + $0x4a0] sm:$0xff]
    %v199 = vld [vmem:[#allocation2 + $0x4a8] sm:$0xff]
    %v200 = vld [vmem:[#allocation2 + $0x4b0] sm:$0xff]
    %v201 = vld [vmem:[#allocation2 + $0x4b8] sm:$0xff]
    %v202 = vld [vmem:[#allocation2 + $0x4c0] sm:$0xff]
    %v203 = vld [vmem:[#allocation2 + $0x4c8] sm:$0xff]
    %v204 = vld [vmem:[#allocation2 + $0x4d0] sm:$0xff]
    %v205 = vld [vmem:[#allocation2 + $0x4d8] sm:$0xff]
    %v206 = vld [vmem:[#allocation2 + $0x4e0] sm:$0xff]
    %v207 = vld [vmem:[#allocation2 + $0x4e8] sm:$0xff]
    %v208 = vld [vmem:[#allocation2 + $0x4f0] sm:$0xff]
    %v209 = vld [vmem:[#allocation2 + $0x4f8] sm:$0xff]
    %v210 = vld [vmem:[#allocation2 + $0x500] sm:$0xff]
    %v211 = vld [vmem:[#allocation2 + $0x508] sm:$0xff]
    %v212 = vld [vmem:[#allocation2 + $0x510] sm:$0xff]
    %v213 = vld [vmem:[#allocation2 + $0x518] sm:$0xff]
    %v214 = vld [vmem:[#allocation2 + $0x520] sm:$0xff]
    %v215 = vld [vmem:[#allocation2 + $0x528] sm:$0xff]
    %v216 = vld [vmem:[#allocation2 + $0x530] sm:$0xff]
    %v217 = vld [vmem:[#allocation2 + $0x538] sm:$0xff]
    %v218 = vld [vmem:[#allocation2 + $0x540] sm:$0xff]
    %v219 = vld [vmem:[#allocation2 + $0x548] sm:$0xff]
    %v220 = vld [vmem:[#allocation2 + $0x550] sm:$0xff]
    %v221 = vld [vmem:[#allocation2 + $0x558] sm:$0xff]
    %v222 = vld [vmem:[#allocation2 + $0x560] sm:$0xff]
    %v223 = vld [vmem:[#allocation2 + $0x568] sm:$0xff]
    %v224 = vld [vmem:[#allocation2 + $0x570] sm:$0xff]
    %v225 = vld [vmem:[#allocation2 + $0x578] sm:$0xff]
    %v226 = vld [vmem:[#allocation2 + $0x580] sm:$0xff]
    %v227 = vld [vmem:[#allocation2 + $0x588] sm:$0xff]
    %v228 = vld [vmem:[#allocation2 + $0x590] sm:$0xff]
    %v229 = vld [vmem:[#allocation2 + $0x598] sm:$0xff]
    %v230 = vld [vmem:[#allocation2 + $0x5a0] sm:$0xff]
    %v231 = vld [vmem:[#allocation2 + $0x5a8] sm:$0xff]
    %v232 = vld [vmem:[#allocation2 + $0x5b0] sm:$0xff]
    %v233 = vld [vmem:[#allocation2 + $0x5b8] sm:$0xff]
    %v234 = vld [vmem:[#allocation2 + $0x5c0] sm:$0xff]
    %v235 = vld [vmem:[#allocation2 + $0x5c8] sm:$0xff]
    %v236 = vld [vmem:[#allocation2 + $0x5d0] sm:$0xff]
    %v237 = vld [vmem:[#allocation2 + $0x5d8] sm:$0xff]
    %v238 = vld [vmem:[#allocation2 + $0x5e0] sm:$0xff]
    %v239 = vld [vmem:[#allocation2 + $0x5e8] sm:$0xff]
    %v240 = vld [vmem:[#allocation2 + $0x5f0] sm:$0xff]
    %v241 = vld [vmem:[#allocation2 + $0x5f8] sm:$0xff]
    %v242 = vld [vmem:[#allocation2 + $0x600] sm:$0xff]
    %v243 = vld [vmem:[#allocation2 + $0x608] sm:$0xff]
    %v244 = vld [vmem:[#allocation2 + $0x610] sm:$0xff]
    %v245 = vld [vmem:[#allocation2 + $0x618] sm:$0xff]
    %v246 = vld [vmem:[%s2] sm:$0xf]
    %v248 = vlaneseq
    %v249 = vshrl.u32 %v248, 7
    %v250 = vsub.s32 0, %v249
    %v251 = vrot.slane %v246, %v250
    %v252 = vlaneseq
    %v253 = vshrl.u32 %v252, 7
    %v254 = vsub.s32 1, %v253
    %v255 = vrot.slane %v246, %v254
    %v256 = vlaneseq
    %v257 = vshrl.u32 %v256, 7
    %v258 = vsub.s32 2, %v257
    %v259 = vrot.slane %v246, %v258
    %v260 = vlaneseq
    %v261 = vshrl.u32 %v260, 7
    %v262 = vsub.s32 3, %v261
    %v263 = vrot.slane %v246, %v262
    %v464 = vunpack.c.l.b16 %v50
    %v465 = vunpack.c.h.b16 %v50
    %v466 = vunpack.c.l.b16 %v51
    %v467 = vunpack.c.h.b16 %v51
    %v468 = vunpack.c.l.b16 %v52
    %v469 = vunpack.c.h.b16 %v52
    %v470 = vunpack.c.l.b16 %v53
    %v471 = vunpack.c.h.b16 %v53
    %v472 = vunpack.c.l.b16 %v54
    %v473 = vunpack.c.h.b16 %v54
    %v474 = vunpack.c.l.b16 %v55
    %v475 = vunpack.c.h.b16 %v55
    %v476 = vunpack.c.l.b16 %v56
    %v477 = vunpack.c.h.b16 %v56
    %v478 = vunpack.c.l.b16 %v57
    %v479 = vunpack.c.h.b16 %v57
    %v480 = vunpack.c.l.b16 %v58
    %v481 = vunpack.c.h.b16 %v58
    %v482 = vunpack.c.l.b16 %v59
    %v483 = vunpack.c.h.b16 %v59
    %v484 = vunpack.c.l.b16 %v60
    %v485 = vunpack.c.h.b16 %v60
    %v486 = vunpack.c.l.b16 %v61
    %v487 = vunpack.c.h.b16 %v61
    %v488 = vunpack.c.l.b16 %v62
    %v489 = vunpack.c.h.b16 %v62
    %v490 = vunpack.c.l.b16 %v63
    %v491 = vunpack.c.h.b16 %v63
    %v492 = vunpack.c.l.b16 %v64
    %v493 = vunpack.c.h.b16 %v64
    %v494 = vunpack.c.l.b16 %v65
    %v495 = vunpack.c.h.b16 %v65
    %v496 = vunpack.c.l.b16 %v66
    %v497 = vunpack.c.h.b16 %v66
    %v498 = vunpack.c.l.b16 %v67
    %v499 = vunpack.c.h.b16 %v67
    %v500 = vunpack.c.l.b16 %v68
    %v501 = vunpack.c.h.b16 %v68
    %v502 = vunpack.c.l.b16 %v69
    %v503 = vunpack.c.h.b16 %v69
    %v504 = vunpack.c.l.b16 %v70
    %v505 = vunpack.c.h.b16 %v70
    %v506 = vunpack.c.l.b16 %v71
    %v507 = vunpack.c.h.b16 %v71
    %v508 = vunpack.c.l.b16 %v72
    %v509 = vunpack.c.h.b16 %v72
    %v510 = vunpack.c.l.b16 %v73
    %v511 = vunpack.c.h.b16 %v73
    %v512 = vunpack.c.l.b16 %v74
    %v513 = vunpack.c.h.b16 %v74
    %v514 = vunpack.c.l.b16 %v75
    %v515 = vunpack.c.h.b16 %v75
    %v516 = vunpack.c.l.b16 %v76
    %v517 = vunpack.c.h.b16 %v76
    %v518 = vunpack.c.l.b16 %v77
    %v519 = vunpack.c.h.b16 %v77
    %v520 = vunpack.c.l.b16 %v78
    %v521 = vunpack.c.h.b16 %v78
    %v522 = vunpack.c.l.b16 %v79
    %v523 = vunpack.c.h.b16 %v79
    %v524 = vunpack.c.l.b16 %v80
    %v525 = vunpack.c.h.b16 %v80
    %v526 = vunpack.c.l.b16 %v81
    %v527 = vunpack.c.h.b16 %v81
    %v528 = vunpack.c.l.b16 %v82
    %v529 = vunpack.c.h.b16 %v82
    %v530 = vunpack.c.l.b16 %v83
    %v531 = vunpack.c.h.b16 %v83
    %v532 = vunpack.c.l.b16 %v84
    %v533 = vunpack.c.h.b16 %v84
    %v534 = vunpack.c.l.b16 %v85
    %v535 = vunpack.c.h.b16 %v85
    %v536 = vunpack.c.l.b16 %v86
    %v537 = vunpack.c.h.b16 %v86
    %v538 = vunpack.c.l.b16 %v87
    %v539 = vunpack.c.h.b16 %v87
    %v540 = vunpack.c.l.b16 %v88
    %v541 = vunpack.c.h.b16 %v88
    %v542 = vunpack.c.l.b16 %v89
    %v543 = vunpack.c.h.b16 %v89
    %v544 = vunpack.c.l.b16 %v90
    %v545 = vunpack.c.h.b16 %v90
    %v546 = vunpack.c.l.b16 %v91
    %v547 = vunpack.c.h.b16 %v91
    %v548 = vunpack.c.l.b16 %v92
    %v549 = vunpack.c.h.b16 %v92
    %v550 = vunpack.c.l.b16 %v93
    %v551 = vunpack.c.h.b16 %v93
    %v552 = vunpack.c.l.b16 %v94
    %v553 = vunpack.c.h.b16 %v94
    %v554 = vunpack.c.l.b16 %v95
    %v555 = vunpack.c.h.b16 %v95
    %v556 = vunpack.c.l.b16 %v96
    %v557 = vunpack.c.h.b16 %v96
    %v558 = vunpack.c.l.b16 %v97
    %v559 = vunpack.c.h.b16 %v97
    %v560 = vunpack.c.l.b16 %v98
    %v561 = vunpack.c.h.b16 %v98
    %v562 = vunpack.c.l.b16 %v99
    %v563 = vunpack.c.h.b16 %v99
    %v564 = vunpack.c.l.b16 %v100
    %v565 = vunpack.c.h.b16 %v100
    %v566 = vunpack.c.l.b16 %v101
    %v567 = vunpack.c.h.b16 %v101
    %v568 = vunpack.c.l.b16 %v102
    %v569 = vunpack.c.h.b16 %v102
    %v570 = vunpack.c.l.b16 %v103
    %v571 = vunpack.c.h.b16 %v103
    %v572 = vunpack.c.l.b16 %v104
    %v573 = vunpack.c.h.b16 %v104
    %v574 = vunpack.c.l.b16 %v105
    %v575 = vunpack.c.h.b16 %v105
    %v576 = vunpack.c.l.b16 %v106
    %v577 = vunpack.c.h.b16 %v106
    %v578 = vunpack.c.l.b16 %v107
    %v579 = vunpack.c.h.b16 %v107
    %v580 = vunpack.c.l.b16 %v108
    %v581 = vunpack.c.h.b16 %v108
    %v582 = vunpack.c.l.b16 %v109
    %v583 = vunpack.c.h.b16 %v109
    %v584 = vunpack.c.l.b16 %v110
    %v585 = vunpack.c.h.b16 %v110
    %v586 = vunpack.c.l.b16 %v111
    %v587 = vunpack.c.h.b16 %v111
    %v588 = vunpack.c.l.b16 %v112
    %v589 = vunpack.c.h.b16 %v112
    %v590 = vunpack.c.l.b16 %v113
    %v591 = vunpack.c.h.b16 %v113
    %v592 = vunpack.c.l.b16 %v114
    %v593 = vunpack.c.h.b16 %v114
    %v594 = vunpack.c.l.b16 %v115
    %v595 = vunpack.c.h.b16 %v115
    %v596 = vunpack.c.l.b16 %v116
    %v597 = vunpack.c.h.b16 %v116
    %v598 = vunpack.c.l.b16 %v117
    %v599 = vunpack.c.h.b16 %v117
    %v600 = vunpack.c.l.b16 %v118
    %v601 = vunpack.c.h.b16 %v118
    %v602 = vunpack.c.l.b16 %v119
    %v603 = vunpack.c.h.b16 %v119
    %v604 = vunpack.c.l.b16 %v120
    %v605 = vunpack.c.h.b16 %v120
    %v606 = vunpack.c.l.b16 %v121
    %v607 = vunpack.c.h.b16 %v121
    %v608 = vunpack.c.l.b16 %v122
    %v609 = vunpack.c.h.b16 %v122
    %v610 = vunpack.c.l.b16 %v123
    %v611 = vunpack.c.h.b16 %v123
    %v612 = vunpack.c.l.b16 %v124
    %v613 = vunpack.c.h.b16 %v124
    %v614 = vunpack.c.l.b16 %v125
    %v615 = vunpack.c.h.b16 %v125
    %v616 = vunpack.c.l.b16 %v126
    %v617 = vunpack.c.h.b16 %v126
    %v618 = vunpack.c.l.b16 %v127
    %v619 = vunpack.c.h.b16 %v127
    %v620 = vunpack.c.l.b16 %v128
    %v621 = vunpack.c.h.b16 %v128
    %v622 = vunpack.c.l.b16 %v129
    %v623 = vunpack.c.h.b16 %v129
    %v624 = vunpack.c.l.b16 %v130
    %v625 = vunpack.c.h.b16 %v130
    %v626 = vunpack.c.l.b16 %v131
    %v627 = vunpack.c.h.b16 %v131
    %v628 = vunpack.c.l.b16 %v132
    %v629 = vunpack.c.h.b16 %v132
    %v630 = vunpack.c.l.b16 %v133
    %v631 = vunpack.c.h.b16 %v133
    %v632 = vunpack.c.l.b16 %v134
    %v633 = vunpack.c.h.b16 %v134
    %v634 = vunpack.c.l.b16 %v135
    %v635 = vunpack.c.h.b16 %v135
    %v636 = vunpack.c.l.b16 %v136
    %v637 = vunpack.c.h.b16 %v136
    %v638 = vunpack.c.l.b16 %v137
    %v639 = vunpack.c.h.b16 %v137
    %v640 = vunpack.c.l.b16 %v138
    %v641 = vunpack.c.h.b16 %v138
    %v642 = vunpack.c.l.b16 %v139
    %v643 = vunpack.c.h.b16 %v139
    %v644 = vunpack.c.l.b16 %v140
    %v645 = vunpack.c.h.b16 %v140
    %v646 = vunpack.c.l.b16 %v141
    %v647 = vunpack.c.h.b16 %v141
    %v648 = vunpack.c.l.b16 %v142
    %v649 = vunpack.c.h.b16 %v142
    %v650 = vunpack.c.l.b16 %v143
    %v651 = vunpack.c.h.b16 %v143
    %v652 = vunpack.c.l.b16 %v144
    %v653 = vunpack.c.h.b16 %v144
    %v654 = vunpack.c.l.b16 %v145
    %v655 = vunpack.c.h.b16 %v145
    %v656 = vunpack.c.l.b16 %v146
    %v657 = vunpack.c.h.b16 %v146
    %v658 = vunpack.c.l.b16 %v147
    %v659 = vunpack.c.h.b16 %v147
    %v660 = vunpack.c.l.b16 %v148
    %v661 = vunpack.c.h.b16 %v148
    %v662 = vunpack.c.l.b16 %v149
    %v663 = vunpack.c.h.b16 %v149
    %v664 = vunpack.c.l.b16 %v150
    %v665 = vunpack.c.h.b16 %v150
    %v666 = vunpack.c.l.b16 %v151
    %v667 = vunpack.c.h.b16 %v151
    %v668 = vunpack.c.l.b16 %v152
    %v669 = vunpack.c.h.b16 %v152
    %v670 = vunpack.c.l.b16 %v153
    %v671 = vunpack.c.h.b16 %v153
    %v672 = vunpack.c.l.b16 %v154
    %v673 = vunpack.c.h.b16 %v154
    %v674 = vunpack.c.l.b16 %v155
    %v675 = vunpack.c.h.b16 %v155
    %v676 = vunpack.c.l.b16 %v156
    %v677 = vunpack.c.h.b16 %v156
    %v678 = vunpack.c.l.b16 %v157
    %v679 = vunpack.c.h.b16 %v157
    %v680 = vunpack.c.l.b16 %v158
    %v681 = vunpack.c.h.b16 %v158
    %v682 = vunpack.c.l.b16 %v159
    %v683 = vunpack.c.h.b16 %v159
    %v684 = vunpack.c.l.b16 %v160
    %v685 = vunpack.c.h.b16 %v160
    %v686 = vunpack.c.l.b16 %v161
    %v687 = vunpack.c.h.b16 %v161
    %v688 = vunpack.c.l.b16 %v162
    %v689 = vunpack.c.h.b16 %v162
    %v690 = vunpack.c.l.b16 %v163
    %v691 = vunpack.c.h.b16 %v163
    %v692 = vunpack.c.l.b16 %v164
    %v693 = vunpack.c.h.b16 %v164
    %v694 = vunpack.c.l.b16 %v165
    %v695 = vunpack.c.h.b16 %v165
    %v696 = vunpack.c.l.b16 %v166
    %v697 = vunpack.c.h.b16 %v166
    %v698 = vunpack.c.l.b16 %v167
    %v699 = vunpack.c.h.b16 %v167
    %v700 = vunpack.c.l.b16 %v168
    %v701 = vunpack.c.h.b16 %v168
    %v702 = vunpack.c.l.b16 %v169
    %v703 = vunpack.c.h.b16 %v169
    %v704 = vunpack.c.l.b16 %v170
    %v705 = vunpack.c.h.b16 %v170
    %v706 = vunpack.c.l.b16 %v171
    %v707 = vunpack.c.h.b16 %v171
    %v708 = vunpack.c.l.b16 %v172
    %v709 = vunpack.c.h.b16 %v172
    %v710 = vunpack.c.l.b16 %v173
    %v711 = vunpack.c.h.b16 %v173
    %v712 = vunpack.c.l.b16 %v174
    %v713 = vunpack.c.h.b16 %v174
    %v714 = vunpack.c.l.b16 %v175
    %v715 = vunpack.c.h.b16 %v175
    %v716 = vunpack.c.l.b16 %v176
    %v717 = vunpack.c.h.b16 %v176
    %v718 = vunpack.c.l.b16 %v177
    %v719 = vunpack.c.h.b16 %v177
    %v720 = vunpack.c.l.b16 %v178
    %v721 = vunpack.c.h.b16 %v178
    %v722 = vunpack.c.l.b16 %v179
    %v723 = vunpack.c.h.b16 %v179
    %v724 = vunpack.c.l.b16 %v180
    %v725 = vunpack.c.h.b16 %v180
    %v726 = vunpack.c.l.b16 %v181
    %v727 = vunpack.c.h.b16 %v181
    %v728 = vunpack.c.l.b16 %v182
    %v729 = vunpack.c.h.b16 %v182
    %v730 = vunpack.c.l.b16 %v183
    %v731 = vunpack.c.h.b16 %v183
    %v732 = vunpack.c.l.b16 %v184
    %v733 = vunpack.c.h.b16 %v184
    %v734 = vunpack.c.l.b16 %v185
    %v735 = vunpack.c.h.b16 %v185
    %v736 = vunpack.c.l.b16 %v186
    %v737 = vunpack.c.h.b16 %v186
    %v738 = vunpack.c.l.b16 %v187
    %v739 = vunpack.c.h.b16 %v187
    %v740 = vunpack.c.l.b16 %v188
    %v741 = vunpack.c.h.b16 %v188
    %v742 = vunpack.c.l.b16 %v189
    %v743 = vunpack.c.h.b16 %v189
    %v744 = vunpack.c.l.b16 %v190
    %v745 = vunpack.c.h.b16 %v190
    %v746 = vunpack.c.l.b16 %v191
    %v747 = vunpack.c.h.b16 %v191
    %v748 = vunpack.c.l.b16 %v192
    %v749 = vunpack.c.h.b16 %v192
    %v750 = vunpack.c.l.b16 %v193
    %v751 = vunpack.c.h.b16 %v193
    %v752 = vunpack.c.l.b16 %v194
    %v753 = vunpack.c.h.b16 %v194
    %v754 = vunpack.c.l.b16 %v195
    %v755 = vunpack.c.h.b16 %v195
    %v756 = vunpack.c.l.b16 %v196
    %v757 = vunpack.c.h.b16 %v196
    %v758 = vunpack.c.l.b16 %v197
    %v759 = vunpack.c.h.b16 %v197
    %v760 = vunpack.c.l.b16 %v198
    %v761 = vunpack.c.h.b16 %v198
    %v762 = vunpack.c.l.b16 %v199
    %v763 = vunpack.c.h.b16 %v199
    %v764 = vunpack.c.l.b16 %v200
    %v765 = vunpack.c.h.b16 %v200
    %v766 = vunpack.c.l.b16 %v201
    %v767 = vunpack.c.h.b16 %v201
    %v768 = vunpack.c.l.b16 %v202
    %v769 = vunpack.c.h.b16 %v202
    %v770 = vunpack.c.l.b16 %v203
    %v771 = vunpack.c.h.b16 %v203
    %v772 = vunpack.c.l.b16 %v204
    %v773 = vunpack.c.h.b16 %v204
    %v774 = vunpack.c.l.b16 %v205
    %v775 = vunpack.c.h.b16 %v205
    %v776 = vunpack.c.l.b16 %v206
    %v777 = vunpack.c.h.b16 %v206
    %v778 = vunpack.c.l.b16 %v207
    %v779 = vunpack.c.h.b16 %v207
    %v780 = vunpack.c.l.b16 %v208
    %v781 = vunpack.c.h.b16 %v208
    %v782 = vunpack.c.l.b16 %v209
    %v783 = vunpack.c.h.b16 %v209
    %v784 = vunpack.c.l.b16 %v210
    %v785 = vunpack.c.h.b16 %v210
    %v786 = vunpack.c.l.b16 %v211
    %v787 = vunpack.c.h.b16 %v211
    %v788 = vunpack.c.l.b16 %v212
    %v789 = vunpack.c.h.b16 %v212
    %v790 = vunpack.c.l.b16 %v213
    %v791 = vunpack.c.h.b16 %v213
    %v792 = vunpack.c.l.b16 %v214
    %v793 = vunpack.c.h.b16 %v214
    %v794 = vunpack.c.l.b16 %v215
    %v795 = vunpack.c.h.b16 %v215
    %v796 = vunpack.c.l.b16 %v216
    %v797 = vunpack.c.h.b16 %v216
    %v798 = vunpack.c.l.b16 %v217
    %v799 = vunpack.c.h.b16 %v217
    %v800 = vunpack.c.l.b16 %v218
    %v801 = vunpack.c.h.b16 %v218
    %v802 = vunpack.c.l.b16 %v219
    %v803 = vunpack.c.h.b16 %v219
    %v804 = vunpack.c.l.b16 %v220
    %v805 = vunpack.c.h.b16 %v220
    %v806 = vunpack.c.l.b16 %v221
    %v807 = vunpack.c.h.b16 %v221
    %v808 = vunpack.c.l.b16 %v222
    %v809 = vunpack.c.h.b16 %v222
    %v810 = vunpack.c.l.b16 %v223
    %v811 = vunpack.c.h.b16 %v223
    %v812 = vunpack.c.l.b16 %v224
    %v813 = vunpack.c.h.b16 %v224
    %v814 = vunpack.c.l.b16 %v225
    %v815 = vunpack.c.h.b16 %v225
    %v816 = vunpack.c.l.b16 %v226
    %v817 = vunpack.c.h.b16 %v226
    %v818 = vunpack.c.l.b16 %v227
    %v819 = vunpack.c.h.b16 %v227
    %v820 = vunpack.c.l.b16 %v228
    %v821 = vunpack.c.h.b16 %v228
    %v822 = vunpack.c.l.b16 %v229
    %v823 = vunpack.c.h.b16 %v229
    %v824 = vunpack.c.l.b16 %v230
    %v825 = vunpack.c.h.b16 %v230
    %v826 = vunpack.c.l.b16 %v231
    %v827 = vunpack.c.h.b16 %v231
    %v828 = vunpack.c.l.b16 %v232
    %v829 = vunpack.c.h.b16 %v232
    %v830 = vunpack.c.l.b16 %v233
    %v831 = vunpack.c.h.b16 %v233
    %v832 = vunpack.c.l.b16 %v234
    %v833 = vunpack.c.h.b16 %v234
    %v834 = vunpack.c.l.b16 %v235
    %v835 = vunpack.c.h.b16 %v235
    %v836 = vunpack.c.l.b16 %v236
    %v837 = vunpack.c.h.b16 %v236
    %v838 = vunpack.c.l.b16 %v237
    %v839 = vunpack.c.h.b16 %v237
    %v840 = vunpack.c.l.b16 %v238
    %v841 = vunpack.c.h.b16 %v238
    %v842 = vunpack.c.l.b16 %v239
    %v843 = vunpack.c.h.b16 %v239
    %v844 = vunpack.c.l.b16 %v240
    %v845 = vunpack.c.h.b16 %v240
    %v846 = vunpack.c.l.b16 %v241
    %v847 = vunpack.c.h.b16 %v241
    %v848 = vunpack.c.l.b16 %v242
    %v849 = vunpack.c.h.b16 %v242
    %v850 = vunpack.c.l.b16 %v243
    %v851 = vunpack.c.h.b16 %v243
    %v852 = vunpack.c.l.b16 %v244
    %v853 = vunpack.c.h.b16 %v244
    %v854 = vunpack.c.l.b16 %v245
    %v855 = vunpack.c.h.b16 %v245
    %v856 = vpack.c.b16 %v468, %v464
    %v857 = vpack.c.b16 %v469, %v465
    %v858 = vpack.c.b16 %v470, %v466
    %v859 = vpack.c.b16 %v471, %v467
    %v860 = vpack.c.b16 %v476, %v472
    %v861 = vpack.c.b16 %v477, %v473
    %v862 = vpack.c.b16 %v478, %v474
    %v863 = vpack.c.b16 %v479, %v475
    %v864 = vpack.c.b16 %v484, %v480
    %v865 = vpack.c.b16 %v485, %v481
    %v866 = vpack.c.b16 %v486, %v482
    %v867 = vpack.c.b16 %v487, %v483
    %v868 = vpack.c.b16 %v492, %v488
    %v869 = vpack.c.b16 %v493, %v489
    %v870 = vpack.c.b16 %v494, %v490
    %v871 = vpack.c.b16 %v495, %v491
    %v872 = vpack.c.b16 %v500, %v496
    %v873 = vpack.c.b16 %v501, %v497
    %v874 = vpack.c.b16 %v502, %v498
    %v875 = vpack.c.b16 %v503, %v499
    %v876 = vpack.c.b16 %v508, %v504
    %v877 = vpack.c.b16 %v509, %v505
    %v878 = vpack.c.b16 %v510, %v506
    %v879 = vpack.c.b16 %v511, %v507
    %v880 = vpack.c.b16 %v516, %v512
    %v881 = vpack.c.b16 %v517, %v513
    %v882 = vpack.c.b16 %v518, %v514
    %v883 = vpack.c.b16 %v519, %v515
    %v884 = vpack.c.b16 %v524, %v520
    %v885 = vpack.c.b16 %v525, %v521
    %v886 = vpack.c.b16 %v526, %v522
    %v887 = vpack.c.b16 %v527, %v523
    %v888 = vpack.c.b16 %v532, %v528
    %v889 = vpack.c.b16 %v533, %v529
    %v890 = vpack.c.b16 %v534, %v530
    %v891 = vpack.c.b16 %v535, %v531
    %v892 = vpack.c.b16 %v540, %v536
    %v893 = vpack.c.b16 %v541, %v537
    %v894 = vpack.c.b16 %v542, %v538
    %v895 = vpack.c.b16 %v543, %v539
    %v896 = vpack.c.b16 %v548, %v544
    %v897 = vpack.c.b16 %v549, %v545
    %v898 = vpack.c.b16 %v550, %v546
    %v899 = vpack.c.b16 %v551, %v547
    %v900 = vpack.c.b16 %v556, %v552
    %v901 = vpack.c.b16 %v557, %v553
    %v902 = vpack.c.b16 %v558, %v554
    %v903 = vpack.c.b16 %v559, %v555
    %v904 = vpack.c.b16 %v564, %v560
    %v905 = vpack.c.b16 %v565, %v561
    %v906 = vpack.c.b16 %v566, %v562
    %v907 = vpack.c.b16 %v567, %v563
    %v908 = vpack.c.b16 %v572, %v568
    %v909 = vpack.c.b16 %v573, %v569
    %v910 = vpack.c.b16 %v574, %v570
    %v911 = vpack.c.b16 %v575, %v571
    %v912 = vpack.c.b16 %v580, %v576
    %v913 = vpack.c.b16 %v581, %v577
    %v914 = vpack.c.b16 %v582, %v578
    %v915 = vpack.c.b16 %v583, %v579
    %v916 = vpack.c.b16 %v588, %v584
    %v917 = vpack.c.b16 %v589, %v585
    %v918 = vpack.c.b16 %v590, %v586
    %v919 = vpack.c.b16 %v591, %v587
    %v920 = vpack.c.b16 %v596, %v592
    %v921 = vpack.c.b16 %v597, %v593
    %v922 = vpack.c.b16 %v598, %v594
    %v923 = vpack.c.b16 %v599, %v595
    %v924 = vpack.c.b16 %v604, %v600
    %v925 = vpack.c.b16 %v605, %v601
    %v926 = vpack.c.b16 %v606, %v602
    %v927 = vpack.c.b16 %v607, %v603
    %v928 = vpack.c.b16 %v612, %v608
    %v929 = vpack.c.b16 %v613, %v609
    %v930 = vpack.c.b16 %v614, %v610
    %v931 = vpack.c.b16 %v615, %v611
    %v932 = vpack.c.b16 %v620, %v616
    %v933 = vpack.c.b16 %v621, %v617
    %v934 = vpack.c.b16 %v622, %v618
    %v935 = vpack.c.b16 %v623, %v619
    %v936 = vpack.c.b16 %v628, %v624
    %v937 = vpack.c.b16 %v629, %v625
    %v938 = vpack.c.b16 %v630, %v626
    %v939 = vpack.c.b16 %v631, %v627
    %v940 = vpack.c.b16 %v636, %v632
    %v941 = vpack.c.b16 %v637, %v633
    %v942 = vpack.c.b16 %v638, %v634
    %v943 = vpack.c.b16 %v639, %v635
    %v944 = vpack.c.b16 %v644, %v640
    %v945 = vpack.c.b16 %v645, %v641
    %v946 = vpack.c.b16 %v646, %v642
    %v947 = vpack.c.b16 %v647, %v643
    %v948 = vpack.c.b16 %v652, %v648
    %v949 = vpack.c.b16 %v653, %v649
    %v950 = vpack.c.b16 %v654, %v650
    %v951 = vpack.c.b16 %v655, %v651
    %v952 = vpack.c.b16 %v660, %v656
    %v953 = vpack.c.b16 %v661, %v657
    %v954 = vpack.c.b16 %v662, %v658
    %v955 = vpack.c.b16 %v663, %v659
    %v956 = vpack.c.b16 %v668, %v664
    %v957 = vpack.c.b16 %v669, %v665
    %v958 = vpack.c.b16 %v670, %v666
    %v959 = vpack.c.b16 %v671, %v667
    %v960 = vpack.c.b16 %v676, %v672
    %v961 = vpack.c.b16 %v677, %v673
    %v962 = vpack.c.b16 %v678, %v674
    %v963 = vpack.c.b16 %v679, %v675
    %v964 = vpack.c.b16 %v684, %v680
    %v965 = vpack.c.b16 %v685, %v681
    %v966 = vpack.c.b16 %v686, %v682
    %v967 = vpack.c.b16 %v687, %v683
    %v968 = vpack.c.b16 %v692, %v688
    %v969 = vpack.c.b16 %v693, %v689
    %v970 = vpack.c.b16 %v694, %v690
    %v971 = vpack.c.b16 %v695, %v691
    %v972 = vpack.c.b16 %v700, %v696
    %v973 = vpack.c.b16 %v701, %v697
    %v974 = vpack.c.b16 %v702, %v698
    %v975 = vpack.c.b16 %v703, %v699
    %v976 = vpack.c.b16 %v708, %v704
    %v977 = vpack.c.b16 %v709, %v705
    %v978 = vpack.c.b16 %v710, %v706
    %v979 = vpack.c.b16 %v711, %v707
    %v980 = vpack.c.b16 %v716, %v712
    %v981 = vpack.c.b16 %v717, %v713
    %v982 = vpack.c.b16 %v718, %v714
    %v983 = vpack.c.b16 %v719, %v715
    %v984 = vpack.c.b16 %v724, %v720
    %v985 = vpack.c.b16 %v725, %v721
    %v986 = vpack.c.b16 %v726, %v722
    %v987 = vpack.c.b16 %v727, %v723
    %v988 = vpack.c.b16 %v732, %v728
    %v989 = vpack.c.b16 %v733, %v729
    %v990 = vpack.c.b16 %v734, %v730
    %v991 = vpack.c.b16 %v735, %v731
    %v992 = vpack.c.b16 %v740, %v736
    %v993 = vpack.c.b16 %v741, %v737
    %v994 = vpack.c.b16 %v742, %v738
    %v995 = vpack.c.b16 %v743, %v739
    %v996 = vpack.c.b16 %v748, %v744
    %v997 = vpack.c.b16 %v749, %v745
    %v998 = vpack.c.b16 %v750, %v746
    %v999 = vpack.c.b16 %v751, %v747
    %v1000 = vpack.c.b16 %v756, %v752
    %v1001 = vpack.c.b16 %v757, %v753
    %v1002 = vpack.c.b16 %v758, %v754
    %v1003 = vpack.c.b16 %v759, %v755
    %v1004 = vpack.c.b16 %v764, %v760
    %v1005 = vpack.c.b16 %v765, %v761
    %v1006 = vpack.c.b16 %v766, %v762
    %v1007 = vpack.c.b16 %v767, %v763
    %v1008 = vpack.c.b16 %v772, %v768
    %v1009 = vpack.c.b16 %v773, %v769
    %v1010 = vpack.c.b16 %v774, %v770
    %v1011 = vpack.c.b16 %v775, %v771
    %v1012 = vpack.c.b16 %v780, %v776
    %v1013 = vpack.c.b16 %v781, %v777
    %v1014 = vpack.c.b16 %v782, %v778
    %v1015 = vpack.c.b16 %v783, %v779
    %v1016 = vpack.c.b16 %v788, %v784
    %v1017 = vpack.c.b16 %v789, %v785
    %v1018 = vpack.c.b16 %v790, %v786
    %v1019 = vpack.c.b16 %v791, %v787
    %v1020 = vpack.c.b16 %v796, %v792
    %v1021 = vpack.c.b16 %v797, %v793
    %v1022 = vpack.c.b16 %v798, %v794
    %v1023 = vpack.c.b16 %v799, %v795
    %v1024 = vpack.c.b16 %v804, %v800
    %v1025 = vpack.c.b16 %v805, %v801
    %v1026 = vpack.c.b16 %v806, %v802
    %v1027 = vpack.c.b16 %v807, %v803
    %v1028 = vpack.c.b16 %v812, %v808
    %v1029 = vpack.c.b16 %v813, %v809
    %v1030 = vpack.c.b16 %v814, %v810
    %v1031 = vpack.c.b16 %v815, %v811
    %v1032 = vpack.c.b16 %v820, %v816
    %v1033 = vpack.c.b16 %v821, %v817
    %v1034 = vpack.c.b16 %v822, %v818
    %v1035 = vpack.c.b16 %v823, %v819
    %v1036 = vpack.c.b16 %v828, %v824
    %v1037 = vpack.c.b16 %v829, %v825
    %v1038 = vpack.c.b16 %v830, %v826
    %v1039 = vpack.c.b16 %v831, %v827
    %v1040 = vpack.c.b16 %v836, %v832
    %v1041 = vpack.c.b16 %v837, %v833
    %v1042 = vpack.c.b16 %v838, %v834
    %v1043 = vpack.c.b16 %v839, %v835
    %v1044 = vpack.c.b16 %v844, %v840
    %v1045 = vpack.c.b16 %v845, %v841
    %v1046 = vpack.c.b16 %v846, %v842
    %v1047 = vpack.c.b16 %v847, %v843
    %v1048 = vpack.c.b16 %v852, %v848
    %v1049 = vpack.c.b16 %v853, %v849
    %v1050 = vpack.c.b16 %v854, %v850
    %v1051 = vpack.c.b16 %v855, %v851
    %vm1248 = vcmask 130048
    %v1250 = vsel %vm1248, %v49, 0
    %1252 = vmatprep.subr.bf16.mxu0 %v857
    %1253 = vmatpush1.bf16.msra.mxu0 %v856
    %1254 = vmatprep.subr.bf16.mxu0 %v861
    %1255 = vmatpush1.bf16.msra.mxu0 %v860
    %1256 = vmatprep.subr.bf16.mxu0 %v865
    %1257 = vmatpush1.bf16.msra.mxu0 %v864
    %1258 = vmatprep.subr.bf16.mxu0 %v869
    %1259 = vmatpush1.bf16.msra.mxu0 %v868
    %1260 = vmatprep.subr.bf16.mxu0 %v873
    %1261 = vmatpush1.bf16.msra.mxu0 %v872
    %1262 = vmatprep.subr.bf16.mxu0 %v877
    %1263 = vmatpush1.bf16.msra.mxu0 %v876
    %1264 = vmatprep.subr.bf16.mxu0 %v881
    %1265 = vmatpush1.bf16.msra.mxu0 %v880
    %1266 = vmatprep.subr.bf16.mxu0 %v885
    %1267 = vmatpush1.bf16.msra.mxu0 %v884
    %1268 = vmatprep.subr.bf16.mxu0 %v889
    %1269 = vmatpush1.bf16.msra.mxu0 %v888
    %1270 = vmatprep.subr.bf16.mxu0 %v893
    %1271 = vmatpush1.bf16.msra.mxu0 %v892
    %1272 = vmatprep.subr.bf16.mxu0 %v897
    %1273 = vmatpush1.bf16.msra.mxu0 %v896
    %1274 = vmatprep.subr.bf16.mxu0 %v901
    %1275 = vmatpush1.bf16.msra.mxu0 %v900
    %1276 = vmatprep.subr.bf16.mxu0 %v905
    %1277 = vmatpush1.bf16.msra.mxu0 %v904
    %1278 = vmatprep.subr.bf16.mxu0 %v909
    %1279 = vmatpush1.bf16.msra.mxu0 %v908
    %1280 = vmatprep.subr.bf16.mxu0 %v913
    %1281 = vmatpush1.bf16.msra.mxu0 %v912
    %1282 = vmatprep.subr.bf16.mxu0 %v917
    %1283 = vmatpush1.bf16.msra.mxu0 %v916
    %1284 = vmatprep.mubr.bf16.mxu0 %v44
    %1285 = vmatmul.mubr.bf16.gmra.mrb[0].mxu0 %v43
    %v1286 = vpop.f32.mrb[0].mxu0
    %v1287 = vadd.f32 %v251, %v1286
    %v1288 = vpop.f32.mrb[0].mxu0
    %v1289 = vadd.f32 %v255, %v1288
    %v1290 = vpop.f32.mrb[0].mxu0
    %v1291 = vpop.f32.mrb[0].mxu0
    %1292 = vdwg.mxu0
    %1293 = vmatprep.subr.bf16.mxu0 %v921
    %1294 = vmatpush1.bf16.msra.mxu0 %v920
    %1295 = vmatprep.subr.bf16.mxu0 %v925
    %1296 = vmatpush1.bf16.msra.mxu0 %v924
    %1297 = vmatprep.subr.bf16.mxu0 %v929
    %1298 = vmatpush1.bf16.msra.mxu0 %v928
    %1299 = vmatprep.subr.bf16.mxu0 %v933
    %1300 = vmatpush1.bf16.msra.mxu0 %v932
    %1301 = vmatprep.subr.bf16.mxu0 %v937
    %1302 = vmatpush1.bf16.msra.mxu0 %v936
    %1303 = vmatprep.subr.bf16.mxu0 %v941
    %1304 = vmatpush1.bf16.msra.mxu0 %v940
    %1305 = vmatprep.subr.bf16.mxu0 %v945
    %1306 = vmatpush1.bf16.msra.mxu0 %v944
    %1307 = vmatprep.subr.bf16.mxu0 %v949
    %1308 = vmatpush1.bf16.msra.mxu0 %v948
    %1309 = vmatprep.subr.bf16.mxu0 %v953
    %1310 = vmatpush1.bf16.msra.mxu0 %v952
    %1311 = vmatprep.subr.bf16.mxu0 %v957
    %1312 = vmatpush1.bf16.msra.mxu0 %v956
    %1313 = vmatprep.subr.bf16.mxu0 %v961
    %1314 = vmatpush1.bf16.msra.mxu0 %v960
    %1315 = vmatprep.subr.bf16.mxu0 %v965
    %1316 = vmatpush1.bf16.msra.mxu0 %v964
    %1317 = vmatprep.subr.bf16.mxu0 %v969
    %1318 = vmatpush1.bf16.msra.mxu0 %v968
    %1319 = vmatprep.subr.bf16.mxu0 %v973
    %1320 = vmatpush1.bf16.msra.mxu0 %v972
    %1321 = vmatprep.subr.bf16.mxu0 %v977
    %1322 = vmatpush1.bf16.msra.mxu0 %v976
    %1323 = vmatprep.subr.bf16.mxu0 %v981
    %1324 = vmatpush1.bf16.msra.mxu0 %v980
    %1325 = vmatprep.mubr.bf16.mxu0 %v46
    %1326 = vmatmul.mubr.bf16.gmra.mrb[0].mxu0 %v45
    %v1327 = vpop.f32.mrb[0].mxu0
    %v1328 = vadd.f32 %v1287, %v1327
    %v1329 = vpop.f32.mrb[0].mxu0
    %v1330 = vadd.f32 %v1289, %v1329
    %v1331 = vpop.f32.mrb[0].mxu0
    %v1332 = vpop.f32.mrb[0].mxu0
    %1333 = vdwg.mxu0
    %1334 = vmatprep.subr.bf16.mxu0 %v985
    %1335 = vmatpush1.bf16.msra.mxu0 %v984
    %1336 = vmatprep.subr.bf16.mxu0 %v989
    %1337 = vmatpush1.bf16.msra.mxu0 %v988
    %1338 = vmatprep.subr.bf16.mxu0 %v993
    %1339 = vmatpush1.bf16.msra.mxu0 %v992
    %1340 = vmatprep.subr.bf16.mxu0 %v997
    %1341 = vmatpush1.bf16.msra.mxu0 %v996
    %1342 = vmatprep.subr.bf16.mxu0 %v1001
    %1343 = vmatpush1.bf16.msra.mxu0 %v1000
    %1344 = vmatprep.subr.bf16.mxu0 %v1005
    %1345 = vmatpush1.bf16.msra.mxu0 %v1004
    %1346 = vmatprep.subr.bf16.mxu0 %v1009
    %1347 = vmatpush1.bf16.msra.mxu0 %v1008
    %1348 = vmatprep.subr.bf16.mxu0 %v1013
    %1349 = vmatpush1.bf16.msra.mxu0 %v1012
    %1350 = vmatprep.subr.bf16.mxu0 %v1017
    %1351 = vmatpush1.bf16.msra.mxu0 %v1016
    %1352 = vmatprep.subr.bf16.mxu0 %v1021
    %1353 = vmatpush1.bf16.msra.mxu0 %v1020
    %1354 = vmatprep.subr.bf16.mxu0 %v1025
    %1355 = vmatpush1.bf16.msra.mxu0 %v1024
    %1356 = vmatprep.subr.bf16.mxu0 %v1029
    %1357 = vmatpush1.bf16.msra.mxu0 %v1028
    %1358 = vmatprep.subr.bf16.mxu0 %v1033
    %1359 = vmatpush1.bf16.msra.mxu0 %v1032
    %1360 = vmatprep.subr.bf16.mxu0 %v1037
    %1361 = vmatpush1.bf16.msra.mxu0 %v1036
    %1362 = vmatprep.subr.bf16.mxu0 %v1041
    %1363 = vmatpush1.bf16.msra.mxu0 %v1040
    %1364 = vmatprep.subr.bf16.mxu0 %v1045
    %1365 = vmatpush1.bf16.msra.mxu0 %v1044
    %1366 = vmatprep.mubr.bf16.mxu0 %v48
    %1367 = vmatmul.mubr.bf16.gmra.mrb[0].mxu0 %v47
    %v1368 = vpop.f32.mrb[0].mxu0
    %v1369 = vadd.f32 %v1328, %v1368
    %v1370 = vpop.f32.mrb[0].mxu0
    %v1371 = vadd.f32 %v1330, %v1370
    %v1372 = vpop.f32.mrb[0].mxu0
    %v1373 = vpop.f32.mrb[0].mxu0
    %1374 = vdwg.mxu0
    %1375 = vmatprep.subr.bf16.mxu0 %v1049
    %1376 = vmatpush1.bf16.msra.mxu0 %v1048
    %1377 = vmatprep.subr.bf16.mxu0 0
    %1378 = vmatpush1.bf16.msra.mxu0 0
    %1379 = vmatprep.subr.bf16.mxu0 0
    %1380 = vmatpush1.bf16.msra.mxu0 0
    %1381 = vmatprep.subr.bf16.mxu0 0
    %1382 = vmatpush1.bf16.msra.mxu0 0
    %1383 = vmatprep.subr.bf16.mxu0 0
    %1384 = vmatpush1.bf16.msra.mxu0 0
    %1385 = vmatprep.subr.bf16.mxu0 0
    %1386 = vmatpush1.bf16.msra.mxu0 0
    %1387 = vmatprep.subr.bf16.mxu0 0
    %1388 = vmatpush1.bf16.msra.mxu0 0
    %1389 = vmatprep.subr.bf16.mxu0 0
    %1390 = vmatpush1.bf16.msra.mxu0 0
    %1391 = vmatprep.subr.bf16.mxu0 0
    %1392 = vmatpush1.bf16.msra.mxu0 0
    %1393 = vmatprep.subr.bf16.mxu0 0
    %1394 = vmatpush1.bf16.msra.mxu0 0
    %1395 = vmatprep.subr.bf16.mxu0 0
    %1396 = vmatpush1.bf16.msra.mxu0 0
    %1397 = vmatprep.subr.bf16.mxu0 0
    %1398 = vmatpush1.bf16.msra.mxu0 0
    %1399 = vmatprep.subr.bf16.mxu0 0
    %1400 = vmatpush1.bf16.msra.mxu0 0
    %1401 = vmatprep.subr.bf16.mxu0 0
    %1402 = vmatpush1.bf16.msra.mxu0 0
    %1403 = vmatprep.subr.bf16.mxu0 0
    %1404 = vmatpush1.bf16.msra.mxu0 0
    %1405 = vmatprep.subr.bf16.mxu0 0
    %1406 = vmatpush1.bf16.msra.mxu0 0
    %1407 = vmatprep.mubr.bf16.mxu0 0
    %1408 = vmatmul.mubr.bf16.gmra.mrb[0].mxu0 %v1250
    %v1409 = vpop.f32.mrb[0].mxu0
    %v1410 = vadd.f32 %v1369, %v1409
    %v1411 = vpop.f32.mrb[0].mxu0
    %v1412 = vadd.f32 %v1371, %v1411
    %v1413 = vpop.f32.mrb[0].mxu0
    %v1414 = vpop.f32.mrb[0].mxu0
    %1415 = vdwg.mxu0
    %1416 = vmatprep.subr.bf16.mxu0 %v859
    %1417 = vmatpush1.bf16.msra.mxu0 %v858
    %1418 = vmatprep.subr.bf16.mxu0 %v863
    %1419 = vmatpush1.bf16.msra.mxu0 %v862
    %1420 = vmatprep.subr.bf16.mxu0 %v867
    %1421 = vmatpush1.bf16.msra.mxu0 %v866
    %1422 = vmatprep.subr.bf16.mxu0 %v871
    %1423 = vmatpush1.bf16.msra.mxu0 %v870
    %1424 = vmatprep.subr.bf16.mxu0 %v875
    %1425 = vmatpush1.bf16.msra.mxu0 %v874
    %1426 = vmatprep.subr.bf16.mxu0 %v879
    %1427 = vmatpush1.bf16.msra.mxu0 %v878
    %1428 = vmatprep.subr.bf16.mxu0 %v883
    %1429 = vmatpush1.bf16.msra.mxu0 %v882
    %1430 = vmatprep.subr.bf16.mxu0 %v887
    %1431 = vmatpush1.bf16.msra.mxu0 %v886
    %1432 = vmatprep.subr.bf16.mxu0 %v891
    %1433 = vmatpush1.bf16.msra.mxu0 %v890
    %1434 = vmatprep.subr.bf16.mxu0 %v895
    %1435 = vmatpush1.bf16.msra.mxu0 %v894
    %1436 = vmatprep.subr.bf16.mxu0 %v899
    %1437 = vmatpush1.bf16.msra.mxu0 %v898
    %1438 = vmatprep.subr.bf16.mxu0 %v903
    %1439 = vmatpush1.bf16.msra.mxu0 %v902
    %1440 = vmatprep.subr.bf16.mxu0 %v907
    %1441 = vmatpush1.bf16.msra.mxu0 %v906
    %1442 = vmatprep.subr.bf16.mxu0 %v911
    %1443 = vmatpush1.bf16.msra.mxu0 %v910
    %1444 = vmatprep.subr.bf16.mxu0 %v915
    %1445 = vmatpush1.bf16.msra.mxu0 %v914
    %1446 = vmatprep.subr.bf16.mxu0 %v919
    %1447 = vmatpush1.bf16.msra.mxu0 %v918
    %1448 = vmatprep.mubr.bf16.mxu0 %v44
    %1449 = vmatmul.mubr.bf16.gmra.mrb[0].mxu0 %v43
    %v1450 = vpop.f32.mrb[0].mxu0
    %v1451 = vadd.f32 %v259, %v1450
    %v1452 = vpop.f32.mrb[0].mxu0
    %v1453 = vadd.f32 %v263, %v1452
    %v1454 = vpop.f32.mrb[0].mxu0
    %v1455 = vpop.f32.mrb[0].mxu0
    %1456 = vdwg.mxu0
    %1457 = vmatprep.subr.bf16.mxu0 %v923
    %1458 = vmatpush1.bf16.msra.mxu0 %v922
    %1459 = vmatprep.subr.bf16.mxu0 %v927
    %1460 = vmatpush1.bf16.msra.mxu0 %v926
    %1461 = vmatprep.subr.bf16.mxu0 %v931
    %1462 = vmatpush1.bf16.msra.mxu0 %v930
    %1463 = vmatprep.subr.bf16.mxu0 %v935
    %1464 = vmatpush1.bf16.msra.mxu0 %v934
    %1465 = vmatprep.subr.bf16.mxu0 %v939
    %1466 = vmatpush1.bf16.msra.mxu0 %v938
    %1467 = vmatprep.subr.bf16.mxu0 %v943
    %1468 = vmatpush1.bf16.msra.mxu0 %v942
    %1469 = vmatprep.subr.bf16.mxu0 %v947
    %1470 = vmatpush1.bf16.msra.mxu0 %v946
    %1471 = vmatprep.subr.bf16.mxu0 %v951
    %1472 = vmatpush1.bf16.msra.mxu0 %v950
    %1473 = vmatprep.subr.bf16.mxu0 %v955
    %1474 = vmatpush1.bf16.msra.mxu0 %v954
    %1475 = vmatprep.subr.bf16.mxu0 %v959
    %1476 = vmatpush1.bf16.msra.mxu0 %v958
    %1477 = vmatprep.subr.bf16.mxu0 %v963
    %1478 = vmatpush1.bf16.msra.mxu0 %v962
    %1479 = vmatprep.subr.bf16.mxu0 %v967
    %1480 = vmatpush1.bf16.msra.mxu0 %v966
    %1481 = vmatprep.subr.bf16.mxu0 %v971
    %1482 = vmatpush1.bf16.msra.mxu0 %v970
    %1483 = vmatprep.subr.bf16.mxu0 %v975
    %1484 = vmatpush1.bf16.msra.mxu0 %v974
    %1485 = vmatprep.subr.bf16.mxu0 %v979
    %1486 = vmatpush1.bf16.msra.mxu0 %v978
    %1487 = vmatprep.subr.bf16.mxu0 %v983
    %1488 = vmatpush1.bf16.msra.mxu0 %v982
    %1489 = vmatprep.mubr.bf16.mxu0 %v46
    %1490 = vmatmul.mubr.bf16.gmra.mrb[0].mxu0 %v45
    %v1491 = vpop.f32.mrb[0].mxu0
    %v1492 = vadd.f32 %v1451, %v1491
    %v1493 = vpop.f32.mrb[0].mxu0
    %v1494 = vadd.f32 %v1453, %v1493
    %v1495 = vpop.f32.mrb[0].mxu0
    %v1496 = vpop.f32.mrb[0].mxu0
    %1497 = vdwg.mxu0
    %1498 = vmatprep.subr.bf16.mxu0 %v987
    %1499 = vmatpush1.bf16.msra.mxu0 %v986
    %1500 = vmatprep.subr.bf16.mxu0 %v991
    %1501 = vmatpush1.bf16.msra.mxu0 %v990
    %1502 = vmatprep.subr.bf16.mxu0 %v995
    %1503 = vmatpush1.bf16.msra.mxu0 %v994
    %1504 = vmatprep.subr.bf16.mxu0 %v999
    %1505 = vmatpush1.bf16.msra.mxu0 %v998
    %1506 = vmatprep.subr.bf16.mxu0 %v1003
    %1507 = vmatpush1.bf16.msra.mxu0 %v1002
    %1508 = vmatprep.subr.bf16.mxu0 %v1007
    %1509 = vmatpush1.bf16.msra.mxu0 %v1006
    %1510 = vmatprep.subr.bf16.mxu0 %v1011
    %1511 = vmatpush1.bf16.msra.mxu0 %v1010
    %1512 = vmatprep.subr.bf16.mxu0 %v1015
    %1513 = vmatpush1.bf16.msra.mxu0 %v1014
    %1514 = vmatprep.subr.bf16.mxu0 %v1019
    %1515 = vmatpush1.bf16.msra.mxu0 %v1018
    %1516 = vmatprep.subr.bf16.mxu0 %v1023
    %1517 = vmatpush1.bf16.msra.mxu0 %v1022
    %1518 = vmatprep.subr.bf16.mxu0 %v1027
    %1519 = vmatpush1.bf16.msra.mxu0 %v1026
    %1520 = vmatprep.subr.bf16.mxu0 %v1031
    %1521 = vmatpush1.bf16.msra.mxu0 %v1030
    %1522 = vmatprep.subr.bf16.mxu0 %v1035
    %1523 = vmatpush1.bf16.msra.mxu0 %v1034
    %1524 = vmatprep.subr.bf16.mxu0 %v1039
    %1525 = vmatpush1.bf16.msra.mxu0 %v1038
    %1526 = vmatprep.subr.bf16.mxu0 %v1043
    %1527 = vmatpush1.bf16.msra.mxu0 %v1042
    %1528 = vmatprep.subr.bf16.mxu0 %v1047
    %1529 = vmatpush1.bf16.msra.mxu0 %v1046
    %1530 = vmatprep.mubr.bf16.mxu0 %v48
    %1531 = vmatmul.mubr.bf16.gmra.mrb[0].mxu0 %v47
    %v1532 = vpop.f32.mrb[0].mxu0
    %v1533 = vadd.f32 %v1492, %v1532
    %v1534 = vpop.f32.mrb[0].mxu0
    %v1535 = vadd.f32 %v1494, %v1534
    %v1536 = vpop.f32.mrb[0].mxu0
    %v1537 = vpop.f32.mrb[0].mxu0
    %1538 = vdwg.mxu0
    %1539 = vmatprep.subr.bf16.mxu0 %v1051
    %1540 = vmatpush1.bf16.msra.mxu0 %v1050
    %1541 = vmatprep.subr.bf16.mxu0 0
    %1542 = vmatpush1.bf16.msra.mxu0 0
    %1543 = vmatprep.subr.bf16.mxu0 0
    %1544 = vmatpush1.bf16.msra.mxu0 0
    %1545 = vmatprep.subr.bf16.mxu0 0
    %1546 = vmatpush1.bf16.msra.mxu0 0
    %1547 = vmatprep.subr.bf16.mxu0 0
    %1548 = vmatpush1.bf16.msra.mxu0 0
    %1549 = vmatprep.subr.bf16.mxu0 0
    %1550 = vmatpush1.bf16.msra.mxu0 0
    %1551 = vmatprep.subr.bf16.mxu0 0
    %1552 = vmatpush1.bf16.msra.mxu0 0
    %1553 = vmatprep.subr.bf16.mxu0 0
    %1554 = vmatpush1.bf16.msra.mxu0 0
    %1555 = vmatprep.subr.bf16.mxu0 0
    %1556 = vmatpush1.bf16.msra.mxu0 0
    %1557 = vmatprep.subr.bf16.mxu0 0
    %1558 = vmatpush1.bf16.msra.mxu0 0
    %1559 = vmatprep.subr.bf16.mxu0 0
    %1560 = vmatpush1.bf16.msra.mxu0 0
    %1561 = vmatprep.subr.bf16.mxu0 0
    %1562 = vmatpush1.bf16.msra.mxu0 0
    %1563 = vmatprep.subr.bf16.mxu0 0
    %1564 = vmatpush1.bf16.msra.mxu0 0
    %1565 = vmatprep.subr.bf16.mxu0 0
    %1566 = vmatpush1.bf16.msra.mxu0 0
    %1567 = vmatprep.subr.bf16.mxu0 0
    %1568 = vmatpush1.bf16.msra.mxu0 0
    %1569 = vmatprep.subr.bf16.mxu0 0
    %1570 = vmatpush1.bf16.msra.mxu0 0
    %1571 = vmatprep.mubr.bf16.mxu0 0
    %1572 = vmatmul.mubr.bf16.gmra.mrb[0].mxu0 %v1250
    %v1573 = vpop.f32.mrb[0].mxu0
    %v1574 = vadd.f32 %v1533, %v1573
    %v1575 = vpop.f32.mrb[0].mxu0
    %v1576 = vadd.f32 %v1535, %v1575
    %v1577 = vpop.f32.mrb[0].mxu0
    %v1578 = vpop.f32.mrb[0].mxu0
    %1579 = vdwg.mxu0
    %v1580 = vmax.f32 %v1410, 0.0
    %v1581 = vmax.f32 %v1412, 0.0
    %v1582 = vmax.f32 %v1574, 0.0
    %v1583 = vmax.f32 %v1576, 0.0
    %v1584 = vpack.c.bf16 %v1580, %v1580
    %v1585 = vpack.c.bf16 %v1581, %v1581
    %v1586 = vpack.c.bf16 %v1582, %v1582
    %v1587 = vpack.c.bf16 %v1583, %v1583
    %v1588 = vld [vmem:[%s3] sm:$0xf]
    %v1589 = vld [vmem:[%s3 + $0x4] sm:$0xf]
    %v1590 = vld [vmem:[%s3 + $0x8] sm:$0xf]
    %v1591 = vld [vmem:[%s3 + $0xc] sm:$0xf]
    %v1592 = vld [vmem:[%s3 + $0x10] sm:$0xf]
    %v1593 = vld [vmem:[%s3 + $0x14] sm:$0xf]
    %v1594 = vld [vmem:[%s3 + $0x18] sm:$0xf]
    %v1595 = vld [vmem:[%s3 + $0x1c] sm:$0xf]
    %v1596 = vld [vmem:[%s3 + $0x20] sm:$0xf]
    %v1597 = vld [vmem:[%s3 + $0x24] sm:$0xf]
    %v1598 = vld [vmem:[%s3 + $0x28] sm:$0xf]
    %v1599 = vld [vmem:[%s3 + $0x2c] sm:$0xf]
    %v1600 = vld [vmem:[%s3 + $0x30] sm:$0xf]
    %v1601 = vld [vmem:[%s3 + $0x34] sm:$0xf]
    %v1602 = vld [vmem:[%s3 + $0x38] sm:$0xf]
    %v1603 = vld [vmem:[%s3 + $0x3c] sm:$0xf]
    %v1604 = vld [vmem:[%s3 + $0x40] sm:$0xf]
    %v1605 = vld [vmem:[%s3 + $0x44] sm:$0xf]
    %v1606 = vld [vmem:[%s3 + $0x48] sm:$0xf]
    %v1607 = vld [vmem:[%s3 + $0x4c] sm:$0xf]
    %v1608 = vld [vmem:[%s3 + $0x50] sm:$0xf]
    %v1609 = vld [vmem:[%s3 + $0x54] sm:$0xf]
    %v1610 = vld [vmem:[%s3 + $0x58] sm:$0xf]
    %v1611 = vld [vmem:[%s3 + $0x5c] sm:$0xf]
    %v1612 = vld [vmem:[%s3 + $0x60] sm:$0xf]
    %v1613 = vld [vmem:[%s3 + $0x64] sm:$0xf]
    %v1614 = vld [vmem:[%s3 + $0x68] sm:$0xf]
    %v1615 = vld [vmem:[%s3 + $0x6c] sm:$0xf]
    %v1616 = vld [vmem:[%s3 + $0x70] sm:$0xf]
    %v1617 = vld [vmem:[%s3 + $0x74] sm:$0xf]
    %v1618 = vld [vmem:[%s3 + $0x78] sm:$0xf]
    %v1619 = vld [vmem:[%s3 + $0x7c] sm:$0xf]
    %v1620 = vld [vmem:[%s3 + $0x80] sm:$0xf]
    %v1621 = vld [vmem:[%s3 + $0x84] sm:$0xf]
    %v1622 = vld [vmem:[%s3 + $0x88] sm:$0xf]
    %v1623 = vld [vmem:[%s3 + $0x8c] sm:$0xf]
    %v1624 = vld [vmem:[%s3 + $0x90] sm:$0xf]
    %v1625 = vld [vmem:[%s3 + $0x94] sm:$0xf]
    %v1626 = vld [vmem:[%s3 + $0x98] sm:$0xf]
    %v1627 = vld [vmem:[%s3 + $0x9c] sm:$0xf]
    %v1628 = vld [vmem:[%s3 + $0xa0] sm:$0xf]
    %v1629 = vld [vmem:[%s3 + $0xa4] sm:$0xf]
    %v1630 = vld [vmem:[%s3 + $0xa8] sm:$0xf]
    %v1631 = vld [vmem:[%s3 + $0xac] sm:$0xf]
    %v1632 = vld [vmem:[%s3 + $0xb0] sm:$0xf]
    %v1633 = vld [vmem:[%s3 + $0xb4] sm:$0xf]
    %v1634 = vld [vmem:[%s3 + $0xb8] sm:$0xf]
    %v1635 = vld [vmem:[%s3 + $0xbc] sm:$0xf]
    %v1636 = vld [vmem:[%s3 + $0xc0] sm:$0xf]
    %v1637 = vld [vmem:[%s3 + $0xc4] sm:$0xf]
    %v1638 = vld [vmem:[%s3 + $0xc8] sm:$0xf]
    %v1639 = vld [vmem:[%s3 + $0xcc] sm:$0xf]
    %v1640 = vld [vmem:[%s3 + $0xd0] sm:$0xf]
    %v1641 = vld [vmem:[%s3 + $0xd4] sm:$0xf]
    %v1642 = vld [vmem:[%s3 + $0xd8] sm:$0xf]
    %v1643 = vld [vmem:[%s3 + $0xdc] sm:$0xf]
    %v1644 = vld [vmem:[%s3 + $0xe0] sm:$0xf]
    %v1645 = vld [vmem:[%s3 + $0xe4] sm:$0xf]
    %v1646 = vld [vmem:[%s3 + $0xe8] sm:$0xf]
    %v1647 = vld [vmem:[%s3 + $0xec] sm:$0xf]
    %v1648 = vld [vmem:[%s3 + $0xf0] sm:$0xf]
    %v1649 = vld [vmem:[%s3 + $0xf4] sm:$0xf]
    %v1650 = vld [vmem:[%s3 + $0xf8] sm:$0xf]
    %v1651 = vld [vmem:[%s3 + $0xfc] sm:$0xf]
    %v1652 = vld [vmem:[%s4] sm:$0x1]
    %v1654 = vlaneseq
    %v1655 = vshrl.u32 %v1654, 7
    %v1656 = vsub.s32 0, %v1655
    %v1657 = vrot.slane %v1652, %v1656
    %v1723 = vunpack.c.l.b16 %v1588
    %v1724 = vunpack.c.l.b16 %v1589
    %v1725 = vunpack.c.l.b16 %v1590
    %v1726 = vunpack.c.l.b16 %v1591
    %v1727 = vunpack.c.l.b16 %v1592
    %v1728 = vunpack.c.l.b16 %v1593
    %v1729 = vunpack.c.l.b16 %v1594
    %v1730 = vunpack.c.l.b16 %v1595
    %v1731 = vunpack.c.l.b16 %v1596
    %v1732 = vunpack.c.l.b16 %v1597
    %v1733 = vunpack.c.l.b16 %v1598
    %v1734 = vunpack.c.l.b16 %v1599
    %v1735 = vunpack.c.l.b16 %v1600
    %v1736 = vunpack.c.l.b16 %v1601
    %v1737 = vunpack.c.l.b16 %v1602
    %v1738 = vunpack.c.l.b16 %v1603
    %v1739 = vunpack.c.l.b16 %v1604
    %v1740 = vunpack.c.l.b16 %v1605
    %v1741 = vunpack.c.l.b16 %v1606
    %v1742 = vunpack.c.l.b16 %v1607
    %v1743 = vunpack.c.l.b16 %v1608
    %v1744 = vunpack.c.l.b16 %v1609
    %v1745 = vunpack.c.l.b16 %v1610
    %v1746 = vunpack.c.l.b16 %v1611
    %v1747 = vunpack.c.l.b16 %v1612
    %v1748 = vunpack.c.l.b16 %v1613
    %v1749 = vunpack.c.l.b16 %v1614
    %v1750 = vunpack.c.l.b16 %v1615
    %v1751 = vunpack.c.l.b16 %v1616
    %v1752 = vunpack.c.l.b16 %v1617
    %v1753 = vunpack.c.l.b16 %v1618
    %v1754 = vunpack.c.l.b16 %v1619
    %v1755 = vunpack.c.l.b16 %v1620
    %v1756 = vunpack.c.l.b16 %v1621
    %v1757 = vunpack.c.l.b16 %v1622
    %v1758 = vunpack.c.l.b16 %v1623
    %v1759 = vunpack.c.l.b16 %v1624
    %v1760 = vunpack.c.l.b16 %v1625
    %v1761 = vunpack.c.l.b16 %v1626
    %v1762 = vunpack.c.l.b16 %v1627
    %v1763 = vunpack.c.l.b16 %v1628
    %v1764 = vunpack.c.l.b16 %v1629
    %v1765 = vunpack.c.l.b16 %v1630
    %v1766 = vunpack.c.l.b16 %v1631
    %v1767 = vunpack.c.l.b16 %v1632
    %v1768 = vunpack.c.l.b16 %v1633
    %v1769 = vunpack.c.l.b16 %v1634
    %v1770 = vunpack.c.l.b16 %v1635
    %v1771 = vunpack.c.l.b16 %v1636
    %v1772 = vunpack.c.l.b16 %v1637
    %v1773 = vunpack.c.l.b16 %v1638
    %v1774 = vunpack.c.l.b16 %v1639
    %v1775 = vunpack.c.l.b16 %v1640
    %v1776 = vunpack.c.l.b16 %v1641
    %v1777 = vunpack.c.l.b16 %v1642
    %v1778 = vunpack.c.l.b16 %v1643
    %v1779 = vunpack.c.l.b16 %v1644
    %v1780 = vunpack.c.l.b16 %v1645
    %v1781 = vunpack.c.l.b16 %v1646
    %v1782 = vunpack.c.l.b16 %v1647
    %v1783 = vunpack.c.l.b16 %v1648
    %v1784 = vunpack.c.l.b16 %v1649
    %v1785 = vunpack.c.l.b16 %v1650
    %v1786 = vunpack.c.l.b16 %v1651
    %v1787 = vpack.c.b16 %v1724, %v1723
    %v1788 = vpack.c.b16 %v1726, %v1725
    %v1789 = vpack.c.b16 %v1728, %v1727
    %v1790 = vpack.c.b16 %v1730, %v1729
    %v1791 = vpack.c.b16 %v1732, %v1731
    %v1792 = vpack.c.b16 %v1734, %v1733
    %v1793 = vpack.c.b16 %v1736, %v1735
    %v1794 = vpack.c.b16 %v1738, %v1737
    %v1795 = vpack.c.b16 %v1740, %v1739
    %v1796 = vpack.c.b16 %v1742, %v1741
    %v1797 = vpack.c.b16 %v1744, %v1743
    %v1798 = vpack.c.b16 %v1746, %v1745
    %v1799 = vpack.c.b16 %v1748, %v1747
    %v1800 = vpack.c.b16 %v1750, %v1749
    %v1801 = vpack.c.b16 %v1752, %v1751
    %v1802 = vpack.c.b16 %v1754, %v1753
    %v1803 = vpack.c.b16 %v1756, %v1755
    %v1804 = vpack.c.b16 %v1758, %v1757
    %v1805 = vpack.c.b16 %v1760, %v1759
    %v1806 = vpack.c.b16 %v1762, %v1761
    %v1807 = vpack.c.b16 %v1764, %v1763
    %v1808 = vpack.c.b16 %v1766, %v1765
    %v1809 = vpack.c.b16 %v1768, %v1767
    %v1810 = vpack.c.b16 %v1770, %v1769
    %v1811 = vpack.c.b16 %v1772, %v1771
    %v1812 = vpack.c.b16 %v1774, %v1773
    %v1813 = vpack.c.b16 %v1776, %v1775
    %v1814 = vpack.c.b16 %v1778, %v1777
    %v1815 = vpack.c.b16 %v1780, %v1779
    %v1816 = vpack.c.b16 %v1782, %v1781
    %v1817 = vpack.c.b16 %v1784, %v1783
    %v1818 = vpack.c.b16 %v1786, %v1785
    %1851 = vmatprep.subr.bf16.mxu0 0
    %1852 = vmatpush1.bf16.msra.mxu0 %v1787
    %1853 = vmatprep.subr.bf16.mxu0 0
    %1854 = vmatpush1.bf16.msra.mxu0 %v1788
    %1855 = vmatprep.subr.bf16.mxu0 0
    %1856 = vmatpush1.bf16.msra.mxu0 %v1789
    %1857 = vmatprep.subr.bf16.mxu0 0
    %1858 = vmatpush1.bf16.msra.mxu0 %v1790
    %1859 = vmatprep.subr.bf16.mxu0 0
    %1860 = vmatpush1.bf16.msra.mxu0 %v1791
    %1861 = vmatprep.subr.bf16.mxu0 0
    %1862 = vmatpush1.bf16.msra.mxu0 %v1792
    %1863 = vmatprep.subr.bf16.mxu0 0
    %1864 = vmatpush1.bf16.msra.mxu0 %v1793
    %1865 = vmatprep.subr.bf16.mxu0 0
    %1866 = vmatpush1.bf16.msra.mxu0 %v1794
    %1867 = vmatprep.subr.bf16.mxu0 0
    %1868 = vmatpush1.bf16.msra.mxu0 %v1795
    %1869 = vmatprep.subr.bf16.mxu0 0
    %1870 = vmatpush1.bf16.msra.mxu0 %v1796
    %1871 = vmatprep.subr.bf16.mxu0 0
    %1872 = vmatpush1.bf16.msra.mxu0 %v1797
    %1873 = vmatprep.subr.bf16.mxu0 0
    %1874 = vmatpush1.bf16.msra.mxu0 %v1798
    %1875 = vmatprep.subr.bf16.mxu0 0
    %1876 = vmatpush1.bf16.msra.mxu0 %v1799
    %1877 = vmatprep.subr.bf16.mxu0 0
    %1878 = vmatpush1.bf16.msra.mxu0 %v1800
    %1879 = vmatprep.subr.bf16.mxu0 0
    %1880 = vmatpush1.bf16.msra.mxu0 %v1801
    %1881 = vmatprep.subr.bf16.mxu0 0
    %1882 = vmatpush1.bf16.msra.mxu0 %v1802
    %1883 = vmatprep.mubr.bf16.mxu0 %v1585
    %1884 = vmatmul.mubr.bf16.gmra.mrb[0].mxu0 %v1584
    %v1885 = vpop.f32.mrb[0].mxu0
    %v1886 = vadd.f32 %v1657, %v1885
    %v1887 = vpop.f32.mrb[0].mxu0
    %v1888 = vpop.f32.mrb[0].mxu0
    %v1889 = vpop.f32.mrb[0].mxu0
    %1890 = vdwg.mxu0
    %1891 = vmatprep.subr.bf16.mxu0 0
    %1892 = vmatpush1.bf16.msra.mxu0 %v1803
    %1893 = vmatprep.subr.bf16.mxu0 0
    %1894 = vmatpush1.bf16.msra.mxu0 %v1804
    %1895 = vmatprep.subr.bf16.mxu0 0
    %1896 = vmatpush1.bf16.msra.mxu0 %v1805
    %1897 = vmatprep.subr.bf16.mxu0 0
    %1898 = vmatpush1.bf16.msra.mxu0 %v1806
    %1899 = vmatprep.subr.bf16.mxu0 0
    %1900 = vmatpush1.bf16.msra.mxu0 %v1807
    %1901 = vmatprep.subr.bf16.mxu0 0
    %1902 = vmatpush1.bf16.msra.mxu0 %v1808
    %1903 = vmatprep.subr.bf16.mxu0 0
    %1904 = vmatpush1.bf16.msra.mxu0 %v1809
    %1905 = vmatprep.subr.bf16.mxu0 0
    %1906 = vmatpush1.bf16.msra.mxu0 %v1810
    %1907 = vmatprep.subr.bf16.mxu0 0
    %1908 = vmatpush1.bf16.msra.mxu0 %v1811
    %1909 = vmatprep.subr.bf16.mxu0 0
    %1910 = vmatpush1.bf16.msra.mxu0 %v1812
    %1911 = vmatprep.subr.bf16.mxu0 0
    %1912 = vmatpush1.bf16.msra.mxu0 %v1813
    %1913 = vmatprep.subr.bf16.mxu0 0
    %1914 = vmatpush1.bf16.msra.mxu0 %v1814
    %1915 = vmatprep.subr.bf16.mxu0 0
    %1916 = vmatpush1.bf16.msra.mxu0 %v1815
    %1917 = vmatprep.subr.bf16.mxu0 0
    %1918 = vmatpush1.bf16.msra.mxu0 %v1816
    %1919 = vmatprep.subr.bf16.mxu0 0
    %1920 = vmatpush1.bf16.msra.mxu0 %v1817
    %1921 = vmatprep.subr.bf16.mxu0 0
    %1922 = vmatpush1.bf16.msra.mxu0 %v1818
    %1923 = vmatprep.mubr.bf16.mxu0 %v1587
    %1924 = vmatmul.mubr.bf16.gmra.mrb[0].mxu0 %v1586
    %v1925 = vpop.f32.mrb[0].mxu0
    %v1926 = vadd.f32 %v1886, %v1925
    %v1927 = vpop.f32.mrb[0].mxu0
    %v1928 = vpop.f32.mrb[0].mxu0
    %v1929 = vpop.f32.mrb[0].mxu0
    %1930 = vdwg.mxu0
    %vm1931 = vcmask 523264
    %1932 = vst.msk [vmem:[#allocation5] sm:$0xff] %vm1931, %v1926
    // Predicated region
    $region26: #{tpu_custom_call.1} parent=1 // pred_check
      _
    $region27: #{tpu_custom_call.1} parent=1 // pred_check_branch
      %1934 = sbr.rel (0) target = $region29
    $region28: #{tpu_custom_call.1} parent=1 // pred_region
      %s1936 = ssub.s32 128, 128
      %1937 = vsyncadd [#allocation4], %s1936
      %s1939 = sshll.u32 [#allocation5], 4
      %s1940 = int_to_ptr.vmem [resolvable:$true] %s1939
      %1942 = dma.vmem_to_hbm [thread:$0]  %s1940, 128, %s5, [#allocation4]
    $region29: #{tpu_custom_call.1} parent=1 // pred_fallthru
      _
    // Predicated region
    $region30: #{tpu_custom_call.1} parent=1 // pred_check
      _
    $region31: #{tpu_custom_call.1} parent=1 // pred_check_branch
      %1944 = sbr.rel (0) target = $region33
    $region32: #{tpu_custom_call.1} parent=1 // pred_region
      %1945 = dma.done [#allocation4], 128
    $region33: #{tpu_custom_call.1} parent=1 // pred_fallthru
      _
    %1946 = vsyncpa [#allocation3], 1
    %1947 = vsyncpa [#allocation4], 1

</llo_original>
